<compile_context>
chip_gen: v7x
topology: tpu7x:2x2x1
jax: 0.10.0
libtpu: 0.0.40
codegen_flags: <defaults>
</compile_context>

<pallas_src>
import numpy as np
import jax
import jax.numpy as jnp
from jax.experimental import pallas as pl
from jax.experimental.pallas import tpu as pltpu

LANE = 128      # channel dims are zero-padded to a multiple of the TPU lane width
SUBLANE = 8

# Set True on v6e/v7x to feed the MXU bf16 operands (f32 accumulation).  Kept False
# here so the strict f32 reference check below stays tight; on v5e keep elementwise
# math in f32 either way.
USE_BF16_MATMUL = False


def _rup(n, m):
    return ((n + m - 1) // m) * m


def _pick_m_tile(M):
    """Largest row tile (<=1024) that divides M and leaves a grid of >= 2 steps."""
    for t in (1024, 512, 256, 128, 64, 32, 16, 8):
        if M % t == 0 and M // t >= 2:
            return t
    return M


def _prelu(z, alpha):
    return jnp.where(z >= 0, z, alpha * z)


def _mxu_dot(a, b):
    if USE_BF16_MATMUL:
        a = a.astype(jnp.bfloat16)
        b = b.astype(jnp.bfloat16)
    return jnp.dot(a, b, preferred_element_type=jnp.float32)


# ----------------------------- Pallas kernels ------------------------------

def _head_kernel(x_ref, s0_ref, b0_ref, a0_ref, w0_ref,
                 ss_ref, bs_ref, as_ref, ws_ref,
                 y0_ref, sc_ref):
    """scale0 and shortcut heads fused: one read of x, two BN+PReLU+1x1-conv."""
    x = x_ref[...]
    z0 = _prelu(x * s0_ref[...] + b0_ref[...], a0_ref[0, 0])
    zs = _prelu(x * ss_ref[...] + bs_ref[...], as_ref[0, 0])
    y0_ref[...] = _mxu_dot(z0, w0_ref[...])
    sc_ref[...] = _mxu_dot(zs, ws_ref[...])


def head_convs(x_flat, p0, psh, tm):
    M, cin_p = x_flat.shape
    cmid_p = p0['w'].shape[1]
    cout_p = psh['w'].shape[1]
    row = lambda i: (i, 0)
    rep2 = lambda i: (0, 0)
    smem = pl.BlockSpec(memory_space=pltpu.MemorySpace.SMEM)
    return pl.pallas_call(
        _head_kernel,
        grid=(M // tm,),
        in_specs=[
            pl.BlockSpec((tm, cin_p), row),
            pl.BlockSpec((1, cin_p), rep2), pl.BlockSpec((1, cin_p), rep2), smem,
            pl.BlockSpec((cin_p, cmid_p), rep2),
            pl.BlockSpec((1, cin_p), rep2), pl.BlockSpec((1, cin_p), rep2), smem,
            pl.BlockSpec((cin_p, cout_p), rep2),
        ],
        out_specs=(pl.BlockSpec((tm, cmid_p), row),
                   pl.BlockSpec((tm, cout_p), row)),
        out_shape=(jax.ShapeDtypeStruct((M, cmid_p), jnp.float32),
                   jax.ShapeDtypeStruct((M, cout_p), jnp.float32)),
        compiler_params=pltpu.CompilerParams(
            dimension_semantics=("parallel",)),
    )(x_flat, p0['scale'], p0['shift'], p0['alpha'], p0['w'],
      psh['scale'], psh['shift'], psh['alpha'], psh['w'])


def _stage_kernel(x_ref, yp_ref, P_ref, U_ref,
                  s1_ref, b1_ref, a1_ref, w1_ref,
                  s2_ref, b2_ref, a2_ref, w3_ref,
                  o_ref, pad_ref):
    """One DAPPM stage, fully fused per batch:
         pooled = P @ x                       (avg-pool as kron(spatial) matmul)
         q      = PReLU(BN(pooled)) @ W_1x1
         up     = U @ q                       (bilinear upsample as kron matmul)
         z      = PReLU(BN(up + y_prev))
         y      = im2col(pad(z)) @ W_3x3      (single K = 9*Cmid contraction)
    """
    _, H, W, Cin = x_ref.shape
    Cmid = w1_ref.shape[1]
    S = H * W

    # ---- pooling branch ----
    x = x_ref[0].reshape(S, Cin)
    pooled = _mxu_dot(P_ref[...], x)                              # (So_p, Cin)
    z1 = _prelu(pooled * s1_ref[...] + b1_ref[...], a1_ref[0, 0])
    q = _mxu_dot(z1, w1_ref[...])                                 # (So_p, Cmid)
    up = _mxu_dot(U_ref[...], q)                                  # (S, Cmid)

    # ---- add + BN + PReLU ----
    u = up + yp_ref[0].reshape(S, Cmid)
    z2 = _prelu(u * s2_ref[...] + b2_ref[...], a2_ref[0, 0]).reshape(H, W, Cmid)

    # ---- 3x3 conv (padding=1): border-only scratch zeroing + one im2col matmul ----
    zrow = jnp.zeros((1, W + 2, Cmid), jnp.float32)
    zcol = jnp.zeros((H + 2, 1, Cmid), jnp.float32)
    pad_ref[0:1, :, :] = zrow
    pad_ref[H + 1:H + 2, :, :] = zrow
    pad_ref[:, 0:1, :] = zcol
    pad_ref[:, W + 1:W + 2, :] = zcol
    pad_ref[1:H + 1, 1:W + 1, :] = z2

    taps = [pad_ref[dh:dh + H, dw:dw + W, :].reshape(S, Cmid)
            for dh in range(3) for dw in range(3)]
    col = jnp.concatenate(taps, axis=1)                           # (S, 9*Cmid)
    o_ref[0] = _mxu_dot(col, w3_ref[...]).reshape(H, W, Cmid)


def stage(x_nhwc, y_prev, Pm, Um, bprm, pprm):
    N, H, W, cin_p = x_nhwc.shape
    cmid_p = bprm['w'].shape[1]
    So_p, S = Pm.shape
    batch4 = lambda n: (n, 0, 0, 0)
    rep2 = lambda n: (0, 0)
    smem = pl.BlockSpec(memory_space=pltpu.MemorySpace.SMEM)
    return pl.pallas_call(
        _stage_kernel,
        grid=(N,),
        in_specs=[
            pl.BlockSpec((1, H, W, cin_p), batch4),
            pl.BlockSpec((1, H, W, cmid_p), batch4),
            pl.BlockSpec((So_p, S), rep2),
            pl.BlockSpec((S, So_p), rep2),
            pl.BlockSpec((1, cin_p), rep2), pl.BlockSpec((1, cin_p), rep2), smem,
            pl.BlockSpec((cin_p, cmid_p), rep2),
            pl.BlockSpec((1, cmid_p), rep2), pl.BlockSpec((1, cmid_p), rep2), smem,
            pl.BlockSpec((9 * cmid_p, cmid_p), rep2),
        ],
        out_specs=pl.BlockSpec((1, H, W, cmid_p), batch4),
        out_shape=jax.ShapeDtypeStruct((N, H, W, cmid_p), jnp.float32),
        scratch_shapes=[pltpu.VMEM((H + 2, W + 2, cmid_p), jnp.float32)],
        compiler_params=pltpu.CompilerParams(
            dimension_semantics=("parallel",)),
    )(x_nhwc, y_prev, Pm, Um,
      bprm['scale'], bprm['shift'], bprm['alpha'], bprm['w'],
      pprm['scale'], pprm['shift'], pprm['alpha'], pprm['w'])


def _compress_kernel(y0_ref, y1_ref, y2_ref, y3_ref, res_ref,
                     sc_ref, sh_ref, a_ref, wc_ref, o_ref):
    """compression(cat([y0..y3])) + shortcut, with the concat never materialized:
    four partial BN+PReLU+matmul contributions summed in VMEM."""
    a = a_ref[0, 0]
    acc = res_ref[...]
    for t, y_ref in enumerate((y0_ref, y1_ref, y2_ref, y3_ref)):
        z = _prelu(y_ref[...] * sc_ref[t:t + 1, :] + sh_ref[t:t + 1, :], a)
        acc = acc + _mxu_dot(z, wc_ref[t])
    o_ref[...] = acc


def compress(y_list, short_flat, cprm, tm):
    M, cmid_p = y_list[0].shape
    cout_p = short_flat.shape[1]
    row = lambda i: (i, 0)
    rep2 = lambda i: (0, 0)
    smem = pl.BlockSpec(memory_space=pltpu.MemorySpace.SMEM)
    return pl.pallas_call(
        _compress_kernel,
        grid=(M // tm,),
        in_specs=[pl.BlockSpec((tm, cmid_p), row)] * 4 + [
            pl.BlockSpec((tm, cout_p), row),
            pl.BlockSpec((4, cmid_p), rep2), pl.BlockSpec((4, cmid_p), rep2), smem,
            pl.BlockSpec((4, cmid_p, cout_p), lambda i: (0, 0, 0)),
        ],
        out_specs=pl.BlockSpec((tm, cout_p), row),
        out_shape=jax.ShapeDtypeStruct((M, cout_p), jnp.float32),
        compiler_params=pltpu.CompilerParams(
            dimension_semantics=("parallel",)),
    )(*y_list, short_flat, cprm['scale'], cprm['shift'], cprm['alpha'], cprm['w'])


# --------------------------- resampling matrices ----------------------------

def avgpool_matrix(n, k, s, p):
    # nn.AvgPool2d(k, s, p) with count_include_pad=True (default): divisor = k.
    out = (n + 2 * p - k) // s + 1
    A = np.zeros((out, n), np.float32)
    for o in range(out):
        for t in range(k):
            i = o * s - p + t
            if 0 <= i < n:
                A[o, i] += 1.0 / k
    return A


def global_pool_matrix(n):
    return np.full((1, n), 1.0 / n, np.float32)


def bilinear_matrix(out_n, in_n):
    # F.interpolate(mode='bilinear', align_corners=False), separable 1-D weights.
    U = np.zeros((out_n, in_n), np.float32)
    if in_n == 1:
        U[:, 0] = 1.0
        return U
    scale = in_n / out_n
    for o in range(out_n):
        src = max((o + 0.5) * scale - 0.5, 0.0)
        i0 = min(int(np.floor(src)), in_n - 1)
        lam = src - i0
        i1 = min(i0 + 1, in_n - 1)
        U[o, i0] += 1.0 - lam
        U[o, i1] += lam
    return U


def _sep_mats(H, W):
    return {
        'scale1': (avgpool_matrix(H, 5, 2, 2), avgpool_matrix(W, 5, 2, 2)),
        'scale2': (avgpool_matrix(H, 9, 4, 4), avgpool_matrix(W, 9, 4, 4)),
        'scale3': (global_pool_matrix(H), global_pool_matrix(W)),
    }


def build_kron_mats(H, W):
    """Per branch: flattened-spatial pooling matrix P (So_p, H*W) and bilinear
    upsample matrix U (H*W, So_p); pooled size padded to a sublane multiple (the
    padded rows are multiplied by zero upsample columns, so they never contribute)."""
    S = H * W
    mats = {}
    for name, (Ah, Aw) in _sep_mats(H, W).items():
        Ho, Wo = Ah.shape[0], Aw.shape[0]
        Uh, Uw = bilinear_matrix(H, Ho), bilinear_matrix(W, Wo)
        P = np.kron(Ah, Aw)                                   # (Ho*Wo, S)
        U = np.kron(Uh, Uw)                                   # (S, Ho*Wo)
        So = Ho * Wo
        So_p = max(SUBLANE, _rup(So, SUBLANE))
        Pp = np.zeros((So_p, S), np.float32); Pp[:So] = P
        Up = np.zeros((S, So_p), np.float32); Up[:, :So] = U
        mats[name] = (jnp.asarray(Pp), jnp.asarray(Up))
    return mats


def build_ref_mats(H, W):
    mats = {}
    for name, (Ah, Aw) in _sep_mats(H, W).items():
        Uh = bilinear_matrix(H, Ah.shape[0])
        Uw = bilinear_matrix(W, Aw.shape[0])
        mats[name] = tuple(jnp.asarray(m) for m in (Ah, Aw, Uh, Uw))
    return mats


# ------------------------------- parameters --------------------------------

def _fold_bn(key, C):
    k1, k2, k3, k4 = jax.random.split(key, 4)
    gamma = 1.0 + 0.1 * jax.random.normal(k1, (C,), jnp.float32)
    beta = 0.1 * jax.random.normal(k2, (C,), jnp.float32)
    mean = 0.1 * jax.random.normal(k3, (C,), jnp.float32)
    var = jax.random.uniform(k4, (C,), jnp.float32, minval=0.5, maxval=1.5)
    scale = gamma / jnp.sqrt(var + 1e-5)
    shift = beta - mean * scale
    return scale.reshape(1, C), shift.reshape(1, C)


def init_1x1(key, cin, cout):
    kb, kw = jax.random.split(key)
    scale, shift = _fold_bn(kb, cin)
    w = jax.random.normal(kw, (cin, cout), jnp.float32) / np.sqrt(cin)
    return dict(scale=scale, shift=shift,
                alpha=jnp.full((1, 1), 0.25, jnp.float32), w=w)


def init_3x3(key, cin, cout):
    kb, kw = jax.random.split(key)
    scale, shift = _fold_bn(kb, cin)
    # layout (9, cin, cout); tap t = kh*3+kw corresponds to torch weight[co, ci, kh, kw]
    w = jax.random.normal(kw, (9, cin, cout), jnp.float32) / np.sqrt(9 * cin)
    return dict(scale=scale, shift=shift,
                alpha=jnp.full((1, 1), 0.25, jnp.float32), w=w)


def init_params(keys, Cin, Cmid, Cout):
    return {
        'scale0':      init_1x1(keys[1], Cin, Cmid),
        'scale1':      init_1x1(keys[2], Cin, Cmid),
        'scale2':      init_1x1(keys[3], Cin, Cmid),
        'scale3':      init_1x1(keys[4], Cin, Cmid),
        'shortcut':    init_1x1(keys[5], Cin, Cout),
        'process1':    init_3x3(keys[6], Cmid, Cmid),
        'process2':    init_3x3(keys[7], Cmid, Cmid),
        'process3':    init_3x3(keys[8], Cmid, Cmid),
        'compression': init_1x1(keys[9], 4 * Cmid, Cout),
    }


# ------------------------- lane padding of parameters -----------------------

def _pad2(a, rows, cols):
    r, c = a.shape
    return jnp.pad(a, ((0, rows - r), (0, cols - c)))


def _pad_1x1(prm, cin_p, cout_p):
    return dict(scale=_pad2(prm['scale'], 1, cin_p),
                shift=_pad2(prm['shift'], 1, cin_p),
                alpha=prm['alpha'],
                w=_pad2(prm['w'], cin_p, cout_p))


def _pad_3x3(prm, c_p):
    c_in, c_out = prm['w'].shape[1], prm['w'].shape[2]
    w = jnp.pad(prm['w'], ((0, 0), (0, c_p - c_in), (0, c_p - c_out)))
    return dict(scale=_pad2(prm['scale'], 1, c_p),
                shift=_pad2(prm['shift'], 1, c_p),
                alpha=prm['alpha'],
                w=w.reshape(9 * c_p, c_p))          # im2col weight: rows grouped by tap


def _pad_compression(prm, cmid, cmid_p, cout_p):
    cout = prm['w'].shape[1]
    sc = jnp.pad(prm['scale'].reshape(4, cmid), ((0, 0), (0, cmid_p - cmid)))
    sh = jnp.pad(prm['shift'].reshape(4, cmid), ((0, 0), (0, cmid_p - cmid)))
    w = jnp.pad(prm['w'].reshape(4, cmid, cout),
                ((0, 0), (0, cmid_p - cmid), (0, cout_p - cout)))
    return dict(scale=sc, shift=sh, alpha=prm['alpha'], w=w)


def pad_params(P, Cin, Cmid, Cout):
    cin_p, cmid_p, cout_p = _rup(Cin, LANE), _rup(Cmid, LANE), _rup(Cout, LANE)
    return {
        'scale0':      _pad_1x1(P['scale0'], cin_p, cmid_p),
        'scale1':      _pad_1x1(P['scale1'], cin_p, cmid_p),
        'scale2':      _pad_1x1(P['scale2'], cin_p, cmid_p),
        'scale3':      _pad_1x1(P['scale3'], cin_p, cmid_p),
        'shortcut':    _pad_1x1(P['shortcut'], cin_p, cout_p),
        'process1':    _pad_3x3(P['process1'], cmid_p),
        'process2':    _pad_3x3(P['process2'], cmid_p),
        'process3':    _pad_3x3(P['process3'], cmid_p),
        'compression': _pad_compression(P['compression'], Cmid, cmid_p, cout_p),
    }


# --------------------------------- forward ---------------------------------

def dappm_forward(x_nchw, Pp, kmats, dims):
    Cin, Cmid, Cout = dims
    cin_p, cmid_p, cout_p = _rup(Cin, LANE), _rup(Cmid, LANE), _rup(Cout, LANE)

    x = jnp.transpose(x_nchw, (0, 2, 3, 1)).astype(jnp.float32)       # NHWC
    N, H, W, _ = x.shape
    if cin_p != Cin:                                                  # lane-dense channels
        x = jnp.pad(x, ((0, 0), (0, 0), (0, 0), (0, cin_p - Cin)))
    M = N * H * W
    tm = _pick_m_tile(M)
    x_flat = x.reshape(M, cin_p)

    # scale0 + shortcut heads, fused (x read once), M-tiled parallel grid.
    y0_flat, short_flat = head_convs(x_flat, Pp['scale0'], Pp['shortcut'], tm)
    y0 = y0_flat.reshape(N, H, W, cmid_p)

    # Each stage (branch + processN) is ONE per-batch pallas_call.
    y1 = stage(x, y0, *kmats['scale1'], Pp['scale1'], Pp['process1'])
    y2 = stage(x, y1, *kmats['scale2'], Pp['scale2'], Pp['process2'])
    y3 = stage(x, y2, *kmats['scale3'], Pp['scale3'], Pp['process3'])

    # compression over the (never materialized) concat + shortcut residual.
    out_flat = compress([y0_flat,
                         y1.reshape(M, cmid_p),
                         y2.reshape(M, cmid_p),
                         y3.reshape(M, cmid_p)],
                        short_flat, Pp['compression'], tm)
    out = out_flat.reshape(N, H, W, cout_p)[..., :Cout]
    return jnp.transpose(out, (0, 3, 1, 2))                            # back to NCHW


# ----------------------- pure-JAX reference (for checking) ------------------

def ref_forward(x_nchw, P, mats):
    x = jnp.transpose(x_nchw, (0, 2, 3, 1)).astype(jnp.float32)
    N, H, W, Cin = x.shape

    def bn_act(v, prm):
        C = prm['scale'].shape[1]
        sc = prm['scale'].reshape((1,) * (v.ndim - 1) + (C,))
        sh = prm['shift'].reshape((1,) * (v.ndim - 1) + (C,))
        z = v * sc + sh
        return jnp.where(z >= 0, z, prm['alpha'][0, 0] * z)

    def c1x1(v, prm):
        return jnp.einsum('...i,io->...o', bn_act(v, prm), prm['w'])

    def res2(v, A, B):
        v = jnp.einsum('oh,nhwc->nowc', A, v)
        return jnp.einsum('pw,nowc->nopc', B, v)

    def c3x3(v, prm):
        z = bn_act(v, prm)
        zp = jnp.pad(z, ((0, 0), (1, 1), (1, 1), (0, 0)))
        out = jnp.zeros(v.shape[:3] + (prm['w'].shape[2],), jnp.float32)
        for t in range(9):
            dh, dw = t // 3, t % 3
            out = out + jnp.einsum('nhwi,io->nhwo',
                                   zp[:, dh:dh + H, dw:dw + W, :], prm['w'][t])
        return out

    y0 = c1x1(x, P['scale0'])
    short = c1x1(x, P['shortcut'])

    def branch(name):
        Ah, Aw, Uh, Uw = mats[name]
        return res2(c1x1(res2(x, Ah, Aw), P[name]), Uh, Uw)

    y1 = c3x3(branch('scale1') + y0, P['process1'])
    y2 = c3x3(branch('scale2') + y1, P['process2'])
    y3 = c3x3(branch('scale3') + y2, P['process3'])
    cat = jnp.concatenate([y0, y1, y2, y3], axis=-1)
    out = c1x1(cat, P['compression']) + short
    return jnp.transpose(out, (0, 3, 1, 2))


# ----------------------------------- main -----------------------------------

if __name__ == "__main__":
    key = jax.random.PRNGKey(0)
    N, Cin, H, W = 2, 4, 16, 16
    Cmid, Cout = 8, 8

    keys = jax.random.split(key, 10)
    x = jax.random.normal(keys[0], (N, Cin, H, W), jnp.float32)

    P = init_params(keys, Cin, Cmid, Cout)      # true-size module parameters
    Pp = pad_params(P, Cin, Cmid, Cout)         # lane-padded copies for the kernels
    kmats = build_kron_mats(H, W)

    out = dappm_forward(x, Pp, kmats, (Cin, Cmid, Cout))
    out = jax.block_until_ready(out)
    assert out.shape == (N, Cout, H, W) and out.dtype == jnp.float32

    ref = jax.block_until_ready(ref_forward(x, P, build_ref_mats(H, W)))
    np.testing.assert_allclose(np.asarray(out), np.asarray(ref),
                               rtol=5e-2, atol=5e-2)
    print("KERNEL_OK")
</pallas_src>

<mosaic_0001>
module attributes {stable_mosaic.version = 11 : i64} {
  func.func @_head_kernel(%arg0: i32, %arg1: memref<256x128xf32, #tpu.memory_space<vmem>>, %arg2: memref<1x128xf32, #tpu.memory_space<vmem>>, %arg3: memref<1x128xf32, #tpu.memory_space<vmem>>, %arg4: memref<1x1xf32, #tpu.memory_space<smem>>, %arg5: memref<128x128xf32, #tpu.memory_space<vmem>>, %arg6: memref<1x128xf32, #tpu.memory_space<vmem>>, %arg7: memref<1x128xf32, #tpu.memory_space<vmem>>, %arg8: memref<1x1xf32, #tpu.memory_space<smem>>, %arg9: memref<128x128xf32, #tpu.memory_space<vmem>>, %arg10: memref<256x128xf32, #tpu.memory_space<vmem>>, %arg11: memref<256x128xf32, #tpu.memory_space<vmem>>) attributes {dimension_semantics = [#tpu.dimension_semantics<parallel>], iteration_bounds = array<i64: 2>, scalar_prefetch = 0 : i64, scratch_operands = 0 : i64, tpu.core_type = #tpu.core_type<tc>, window_params = [{transform_indices = @transform_0, window_bounds = array<i64: 256, 128>}, {pipeline_mode = #tpu.pipeline_mode<synchronous>, transform_indices = @transform_1, window_bounds = array<i64: 1, 128>}, {pipeline_mode = #tpu.pipeline_mode<synchronous>, transform_indices = @transform_2, window_bounds = array<i64: 1, 128>}, {transform_indices = @transform_3, window_bounds = array<i64: 1, 1>}, {pipeline_mode = #tpu.pipeline_mode<synchronous>, transform_indices = @transform_4, window_bounds = array<i64: 128, 128>}, {pipeline_mode = #tpu.pipeline_mode<synchronous>, transform_indices = @transform_5, window_bounds = array<i64: 1, 128>}, {pipeline_mode = #tpu.pipeline_mode<synchronous>, transform_indices = @transform_6, window_bounds = array<i64: 1, 128>}, {transform_indices = @transform_7, window_bounds = array<i64: 1, 1>}, {pipeline_mode = #tpu.pipeline_mode<synchronous>, transform_indices = @transform_8, window_bounds = array<i64: 128, 128>}, {transform_indices = @transform_9, window_bounds = array<i64: 256, 128>}, {transform_indices = @transform_10, window_bounds = array<i64: 256, 128>}]} {
    %c0 = arith.constant 0 : index
    %c0_0 = arith.constant 0 : index
    %0 = vector.load %arg1[%c0, %c0_0] : memref<256x128xf32, #tpu.memory_space<vmem>>, vector<256x128xf32>
    %c0_1 = arith.constant 0 : index
    %c0_2 = arith.constant 0 : index
    %1 = vector.load %arg2[%c0_1, %c0_2] : memref<1x128xf32, #tpu.memory_space<vmem>>, vector<1x128xf32>
    %2 = vector.broadcast %1 : vector<1x128xf32> to vector<256x128xf32>
    %3 = arith.mulf %0, %2 : vector<256x128xf32>
    %c0_3 = arith.constant 0 : index
    %c0_4 = arith.constant 0 : index
    %4 = vector.load %arg3[%c0_3, %c0_4] : memref<1x128xf32, #tpu.memory_space<vmem>>, vector<1x128xf32>
    %5 = vector.broadcast %4 : vector<1x128xf32> to vector<256x128xf32>
    %6 = arith.addf %3, %5 : vector<256x128xf32>
    %c0_5 = arith.constant 0 : index
    %c0_6 = arith.constant 0 : index
    %7 = memref.load %arg4[%c0_5, %c0_6] : memref<1x1xf32, #tpu.memory_space<smem>>
    %cst = arith.constant 0.000000e+00 : f32
    %8 = vector.broadcast %cst : f32 to vector<256x128xf32>
    %9 = arith.cmpf oge, %6, %8 : vector<256x128xf32>
    %10 = vector.broadcast %7 : f32 to vector<256x128xf32>
    %11 = arith.mulf %10, %6 : vector<256x128xf32>
    %12 = arith.select %9, %6, %11 : vector<256x128xi1>, vector<256x128xf32>
    %c0_7 = arith.constant 0 : index
    %c0_8 = arith.constant 0 : index
    %13 = vector.load %arg6[%c0_7, %c0_8] : memref<1x128xf32, #tpu.memory_space<vmem>>, vector<1x128xf32>
    %14 = vector.broadcast %13 : vector<1x128xf32> to vector<256x128xf32>
    %15 = arith.mulf %0, %14 : vector<256x128xf32>
    %c0_9 = arith.constant 0 : index
    %c0_10 = arith.constant 0 : index
    %16 = vector.load %arg7[%c0_9, %c0_10] : memref<1x128xf32, #tpu.memory_space<vmem>>, vector<1x128xf32>
    %17 = vector.broadcast %16 : vector<1x128xf32> to vector<256x128xf32>
    %18 = arith.addf %15, %17 : vector<256x128xf32>
    %c0_11 = arith.constant 0 : index
    %c0_12 = arith.constant 0 : index
    %19 = memref.load %arg8[%c0_11, %c0_12] : memref<1x1xf32, #tpu.memory_space<smem>>
    %cst_13 = arith.constant 0.000000e+00 : f32
    %20 = vector.broadcast %cst_13 : f32 to vector<256x128xf32>
    %21 = arith.cmpf oge, %18, %20 : vector<256x128xf32>
    %22 = vector.broadcast %19 : f32 to vector<256x128xf32>
    %23 = arith.mulf %22, %18 : vector<256x128xf32>
    %24 = arith.select %21, %18, %23 : vector<256x128xi1>, vector<256x128xf32>
    %c0_14 = arith.constant 0 : index
    %c0_15 = arith.constant 0 : index
    %25 = vector.load %arg5[%c0_14, %c0_15] : memref<128x128xf32, #tpu.memory_space<vmem>>, vector<128x128xf32>
    %cst_16 = arith.constant dense<0.000000e+00> : vector<256x128xf32>
    %26 = tpu.matmul %12, %25, %cst_16 {dimension_numbers = #tpu.dot_dimension_numbers<[1], [0], [0], [1], [0, 0, 1, 1], [], []>} : vector<256x128xf32>, vector<128x128xf32>, vector<256x128xf32> -> vector<256x128xf32>
    %c0_17 = arith.constant 0 : index
    %c0_18 = arith.constant 0 : index
    %27 = vector.load %arg10[%c0_17, %c0_18] : memref<256x128xf32, #tpu.memory_space<vmem>>, vector<256x128xf32>
    tpu.vector_store %arg10[%c0_17, %c0_18], %26 {strides = array<i32>} : memref<256x128xf32, #tpu.memory_space<vmem>>, vector<256x128xf32>,
    %c0_19 = arith.constant 0 : index
    %c0_20 = arith.constant 0 : index
    %28 = vector.load %arg9[%c0_19, %c0_20] : memref<128x128xf32, #tpu.memory_space<vmem>>, vector<128x128xf32>
    %cst_21 = arith.constant dense<0.000000e+00> : vector<256x128xf32>
    %29 = tpu.matmul %24, %28, %cst_21 {dimension_numbers = #tpu.dot_dimension_numbers<[1], [0], [0], [1], [0, 0, 1, 1], [], []>} : vector<256x128xf32>, vector<128x128xf32>, vector<256x128xf32> -> vector<256x128xf32>
    %c0_22 = arith.constant 0 : index
    %c0_23 = arith.constant 0 : index
    %30 = vector.load %arg11[%c0_22, %c0_23] : memref<256x128xf32, #tpu.memory_space<vmem>>, vector<256x128xf32>
    tpu.vector_store %arg11[%c0_22, %c0_23], %29 {strides = array<i32>} : memref<256x128xf32, #tpu.memory_space<vmem>>, vector<256x128xf32>,
    return
  }
  func.func @transform_0(%arg0: i32) -> (i32, i32) {
    %c0_i32 = arith.constant 0 : i32
    %c0_i32_0 = arith.constant 0 : i32
    return %arg0, %c0_i32 : i32, i32
  }
  func.func @transform_1(%arg0: i32) -> (i32, i32) {
    %c0_i32 = arith.constant 0 : i32
    %c0_i32_0 = arith.constant 0 : i32
    %c0_i32_1 = arith.constant 0 : i32
    return %c0_i32, %c0_i32_0 : i32, i32
  }
  func.func @transform_2(%arg0: i32) -> (i32, i32) {
    %c0_i32 = arith.constant 0 : i32
    %c0_i32_0 = arith.constant 0 : i32
    %c0_i32_1 = arith.constant 0 : i32
    return %c0_i32, %c0_i32_0 : i32, i32
  }
  func.func @transform_3(%arg0: i32) -> (i32, i32) {
    %c0_i32 = arith.constant 0 : i32
    %c0_i32_0 = arith.constant 0 : i32
    %c0_i32_1 = arith.constant 0 : i32
    return %c0_i32, %c0_i32_0 : i32, i32
  }
  func.func @transform_4(%arg0: i32) -> (i32, i32) {
    %c0_i32 = arith.constant 0 : i32
    %c0_i32_0 = arith.constant 0 : i32
    %c0_i32_1 = arith.constant 0 : i32
    return %c0_i32, %c0_i32_0 : i32, i32
  }
  func.func @transform_5(%arg0: i32) -> (i32, i32) {
    %c0_i32 = arith.constant 0 : i32
    %c0_i32_0 = arith.constant 0 : i32
    %c0_i32_1 = arith.constant 0 : i32
    return %c0_i32, %c0_i32_0 : i32, i32
  }
  func.func @transform_6(%arg0: i32) -> (i32, i32) {
    %c0_i32 = arith.constant 0 : i32
    %c0_i32_0 = arith.constant 0 : i32
    %c0_i32_1 = arith.constant 0 : i32
    return %c0_i32, %c0_i32_0 : i32, i32
  }
  func.func @transform_7(%arg0: i32) -> (i32, i32) {
    %c0_i32 = arith.constant 0 : i32
    %c0_i32_0 = arith.constant 0 : i32
    %c0_i32_1 = arith.constant 0 : i32
    return %c0_i32, %c0_i32_0 : i32, i32
  }
  func.func @transform_8(%arg0: i32) -> (i32, i32) {
    %c0_i32 = arith.constant 0 : i32
    %c0_i32_0 = arith.constant 0 : i32
    %c0_i32_1 = arith.constant 0 : i32
    return %c0_i32, %c0_i32_0 : i32, i32
  }
  func.func @transform_9(%arg0: i32) -> (i32, i32) {
    %c0_i32 = arith.constant 0 : i32
    %c0_i32_0 = arith.constant 0 : i32
    return %arg0, %c0_i32 : i32, i32
  }
  func.func @transform_10(%arg0: i32) -> (i32, i32) {
    %c0_i32 = arith.constant 0 : i32
    %c0_i32_0 = arith.constant 0 : i32
    return %arg0, %c0_i32 : i32, i32
  }
}

</mosaic_0001>

<llo_original>
// kernel: tpu_custom_call.1
$region0: #{tpu_custom_call.1}
  #allocation0 [shape = 'u32[]', space=smem, size = 0x4, offset = 0x4, fixed_abs, tag = 'smem constant byte address 0x4 - core index']
  #allocation1 [shape = 'u32[144,128]{1,0:T(1,128)}', space=vmem, size = 0x12000, scoped, tag = 'internal scratch']
  #allocation2 [shape = 'f32[1,1]{1,0:T(1,128)S(6)}', space=smem, size = 0x200, scoped, tag = 'scoped memory for tpu_custom_call.1']
  #allocation3 [shape = 'f32[1,1]{1,0:T(1,128)S(6)}', space=smem, size = 0x200, scoped, tag = 'scoped memory for tpu_custom_call.1']
  %s0 = inlined_call_operand.hbm [shape: f32[512,128], index: 0, kind: input, shape index: {}]
  %s1 = inlined_call_operand.vmem [shape: f32[1,128], index: 1, kind: input, shape index: {}]
  %s2 = inlined_call_operand.vmem [shape: f32[1,128], index: 2, kind: input, shape index: {}]
  %s3 = inlined_call_operand.<no memory space> [shape: f32[1,1], index: 3, kind: input, shape index: {}]
  %s4 = inlined_call_operand.hbm [shape: f32[128,128], index: 4, kind: input, shape index: {}]
  %s5 = inlined_call_operand.vmem [shape: f32[1,128], index: 5, kind: input, shape index: {}]
  %s6 = inlined_call_operand.vmem [shape: f32[1,128], index: 6, kind: input, shape index: {}]
  %s7 = inlined_call_operand.<no memory space> [shape: f32[1,1], index: 7, kind: input, shape index: {}]
  %s8 = inlined_call_operand.hbm [shape: f32[128,128], index: 8, kind: input, shape index: {}]
  %s9 = inlined_call_operand.hbm [shape: f32[512,128], index: 9, kind: output, shape index: {0}]
  %s10 = inlined_call_operand.hbm [shape: f32[512,128], index: 10, kind: output, shape index: {1}]
  %11 = xla_tuple %s9, %s10
  %s12 = sld [smem:[#allocation0]]
  $region89: #{tpu_custom_call.1} parent=0
    _
  %s14 = ssub.s32 1, %s12
  %s15 = scalar_select 0, %s14, %s12
  %16 = sst [smem:[#allocation2]] %s3
  %17 = sst [smem:[#allocation3]] %s7
  $region1: #{tpu_custom_call.1} parent=0
    #allocation4 [shape = 'u8[262144]{0}', space=vmem, size = 0x40000, scoped, tag = 'input window, operand 0']
    #allocation5 [shape = 's32[2]{0}', space=sflag, size = 0x8, scoped, tag = 'scoped memory for tpu_custom_call.1']
    #allocation6 [shape = 's32[2]{0}', space=sflag, size = 0x8, scoped, tag = 'scoped memory for tpu_custom_call.1']
    #allocation7 [shape = 'u8[65536]{0}', space=vmem, size = 0x10000, scoped, tag = 'input window, operand 4, single buffered']
    #allocation8 [shape = 's32[1]{0}', space=sflag, size = 0x4, scoped, tag = 'scoped memory for tpu_custom_call.1']
    #allocation9 [shape = 'u8[65536]{0}', space=vmem, size = 0x10000, scoped, tag = 'input window, operand 8, single buffered']
    #allocation10 [shape = 'u8[262144]{0}', space=vmem, size = 0x40000, scoped, tag = 'output window, operand 0']
    #allocation11 [shape = 'u8[262144]{0}', space=vmem, size = 0x40000, scoped, tag = 'output window, operand 1']
    #allocation12 [shape = 's32[2]{0}', space=sflag, size = 0x8, scoped, tag = 'scoped memory for tpu_custom_call.1']
    %18 = vsyncpa [#allocation5], 0
    %s19 = scalar_lea.sflag [#allocation5], 1
    %20 = vsyncpa %s19, 0
    %21 = vsyncpa [#allocation8], 0
    %22 = vsyncpa [#allocation6], 0
    %s23 = scalar_lea.sflag [#allocation6], 1
    %24 = vsyncpa %s23, 0
    %25 = vsyncpa [#allocation12], 0
    %s26 = scalar_lea.sflag [#allocation12], 1
    %27 = vsyncpa %s26, 0
    loop: start=0, step=1, limit=4
    $region2: #{tpu_custom_call.1} parent=1 // loop_pre_header
      _
    $region3: #{tpu_custom_call.1} parent=1 // loop_header
      %s29 = sphi 0, %s33
      %p30 = scmp.ge.s32.totalorder %s29, 4
      %s39 = sphi 0, %s41
      %s42 = sphi 0, %s39
      %s43 = sphi 0, %s42
      %s59 = sphi 0, %s43
      %s63 = sphi 0, %s63
      %s65 = sphi 0, %s63
      %s66 = sphi 0, %s65
      %s80 = sphi 0, %s66
      %s84 = sphi 0, %s84
      %s86 = sphi 0, %s84
      %s87 = sphi 0, %s86
      %s101 = sphi 0, %s87
      %s105 = sphi 0, %s105
      %s107 = sphi 0, %s105
      %s108 = sphi 0, %s107
      %s122 = sphi 0, %s108
      %s126 = sphi 0, %s126
      %s128 = sphi 0, %s126
      %s129 = sphi 0, %s128
      %s143 = sphi 0, %s129
      %s147 = sphi 0, %s147
      %s149 = sphi 0, %s147
      %s150 = sphi 0, %s149
      %s164 = sphi 0, %s150
      %s168 = sphi 0, %s168
      %s170 = sphi 0, %s168
      %s171 = sphi 0, %s170
      %s185 = sphi 0, %s171
      %s189 = sphi 0, %s189
      %s191 = sphi 0, %s189
      %s192 = sphi 0, %s191
      %s206 = sphi 0, %s192
      %s210 = sphi 0, %s210
      %s212 = sphi 0, %s210
      %s213 = sphi 0, %s212
      %s227 = sphi 0, %s213
      %s233 = sphi 0, %s235
      %s236 = sphi 0, %s233
      %s237 = sphi 0, %s236
      %s253 = sphi 0, %s237
      %s259 = sphi 0, %s261
      %s262 = sphi 0, %s259
      %s263 = sphi 0, %s262
      %s279 = sphi 0, %s263
    $region4: #{tpu_custom_call.1} parent=1 // loop_header_branch
      %32 = sbr.rel (%p30) target = $region8
    $region5: #{tpu_custom_call.1} parent=1 // loop_body
      %s34 = ssub.s32 %s29, 1
      %s35 = ssub.s32 %s29, 2
      %s36 = sadd.s32 %s29, 1
      %s37 = ssub.s32 %s29, %s36
      %p38 = scmp.eq.s32.totalorder %s37, 0
      %s40 = sadd.s32 %s39, 1
      %s41 = scalar_select %p38, %s39, %s40
      %p44 = pneg %p38
      %p45 = scmp.eq.s32.totalorder %s29, 1
      %p46 = por %p44, %p45
      %p47 = scmp.ne.s32.totalorder %s39, %s42
      %p48 = scmp.eq.s32.totalorder %s29, 0
      %p49 = por %p47, %p48
      %p50 = scmp.ne.s32.totalorder %s39, %s42
      %p51 = scmp.eq.s32.totalorder %s34, 1
      %p52 = por %p50, %p51
      %p53 = scmp.ne.s32.totalorder %s42, %s43
      %p54 = scmp.eq.s32.totalorder %s34, 0
      %p55 = por %p53, %p54
      %p56 = scmp.ne.s32.totalorder %s42, %s43
      %p57 = scmp.eq.s32.totalorder %s35, 1
      %p58 = por %p56, %p57
      %p60 = scmp.ne.s32.totalorder %s43, %s59
      %p61 = scmp.eq.s32.totalorder %s35, 0
      %p62 = por %p60, %p61
      %s64 = sadd.s32 %s63, 1
      %p67 = scmp.eq.s32.totalorder %s29, 1
      %p68 = scmp.ne.s32.totalorder %s63, %s65
      %p69 = scmp.eq.s32.totalorder %s29, 0
      %p70 = por %p68, %p69
      %p71 = scmp.ne.s32.totalorder %s63, %s65
      %p72 = scmp.eq.s32.totalorder %s34, 1
      %p73 = por %p71, %p72
      %p74 = scmp.ne.s32.totalorder %s65, %s66
      %p75 = scmp.eq.s32.totalorder %s34, 0
      %p76 = por %p74, %p75
      %p77 = scmp.ne.s32.totalorder %s65, %s66
      %p78 = scmp.eq.s32.totalorder %s35, 1
      %p79 = por %p77, %p78
      %p81 = scmp.ne.s32.totalorder %s66, %s80
      %p82 = scmp.eq.s32.totalorder %s35, 0
      %p83 = por %p81, %p82
      %s85 = sadd.s32 %s84, 1
      %p88 = scmp.eq.s32.totalorder %s29, 1
      %p89 = scmp.ne.s32.totalorder %s84, %s86
      %p90 = scmp.eq.s32.totalorder %s29, 0
      %p91 = por %p89, %p90
      %p92 = scmp.ne.s32.totalorder %s84, %s86
      %p93 = scmp.eq.s32.totalorder %s34, 1
      %p94 = por %p92, %p93
      %p95 = scmp.ne.s32.totalorder %s86, %s87
      %p96 = scmp.eq.s32.totalorder %s34, 0
      %p97 = por %p95, %p96
      %p98 = scmp.ne.s32.totalorder %s86, %s87
      %p99 = scmp.eq.s32.totalorder %s35, 1
      %p100 = por %p98, %p99
      %p102 = scmp.ne.s32.totalorder %s87, %s101
      %p103 = scmp.eq.s32.totalorder %s35, 0
      %p104 = por %p102, %p103
      %s106 = sadd.s32 %s105, 1
      %p109 = scmp.eq.s32.totalorder %s29, 1
      %p110 = scmp.ne.s32.totalorder %s105, %s107
      %p111 = scmp.eq.s32.totalorder %s29, 0
      %p112 = por %p110, %p111
      %p113 = scmp.ne.s32.totalorder %s105, %s107
      %p114 = scmp.eq.s32.totalorder %s34, 1
      %p115 = por %p113, %p114
      %p116 = scmp.ne.s32.totalorder %s107, %s108
      %p117 = scmp.eq.s32.totalorder %s34, 0
      %p118 = por %p116, %p117
      %p119 = scmp.ne.s32.totalorder %s107, %s108
      %p120 = scmp.eq.s32.totalorder %s35, 1
      %p121 = por %p119, %p120
      %p123 = scmp.ne.s32.totalorder %s108, %s122
      %p124 = scmp.eq.s32.totalorder %s35, 0
      %p125 = por %p123, %p124
      %s127 = sadd.s32 %s126, 1
      %p130 = scmp.eq.s32.totalorder %s29, 1
      %p131 = scmp.ne.s32.totalorder %s126, %s128
      %p132 = scmp.eq.s32.totalorder %s29, 0
      %p133 = por %p131, %p132
      %p134 = scmp.ne.s32.totalorder %s126, %s128
      %p135 = scmp.eq.s32.totalorder %s34, 1
      %p136 = por %p134, %p135
      %p137 = scmp.ne.s32.totalorder %s128, %s129
      %p138 = scmp.eq.s32.totalorder %s34, 0
      %p139 = por %p137, %p138
      %p140 = scmp.ne.s32.totalorder %s128, %s129
      %p141 = scmp.eq.s32.totalorder %s35, 1
      %p142 = por %p140, %p141
      %p144 = scmp.ne.s32.totalorder %s129, %s143
      %p145 = scmp.eq.s32.totalorder %s35, 0
      %p146 = por %p144, %p145
      %s148 = sadd.s32 %s147, 1
      %p151 = scmp.eq.s32.totalorder %s29, 1
      %p152 = scmp.ne.s32.totalorder %s147, %s149
      %p153 = scmp.eq.s32.totalorder %s29, 0
      %p154 = por %p152, %p153
      %p155 = scmp.ne.s32.totalorder %s147, %s149
      %p156 = scmp.eq.s32.totalorder %s34, 1
      %p157 = por %p155, %p156
      %p158 = scmp.ne.s32.totalorder %s149, %s150
      %p159 = scmp.eq.s32.totalorder %s34, 0
      %p160 = por %p158, %p159
      %p161 = scmp.ne.s32.totalorder %s149, %s150
      %p162 = scmp.eq.s32.totalorder %s35, 1
      %p163 = por %p161, %p162
      %p165 = scmp.ne.s32.totalorder %s150, %s164
      %p166 = scmp.eq.s32.totalorder %s35, 0
      %p167 = por %p165, %p166
      %s169 = sadd.s32 %s168, 1
      %p172 = scmp.eq.s32.totalorder %s29, 1
      %p173 = scmp.ne.s32.totalorder %s168, %s170
      %p174 = scmp.eq.s32.totalorder %s29, 0
      %p175 = por %p173, %p174
      %p176 = scmp.ne.s32.totalorder %s168, %s170
      %p177 = scmp.eq.s32.totalorder %s34, 1
      %p178 = por %p176, %p177
      %p179 = scmp.ne.s32.totalorder %s170, %s171
      %p180 = scmp.eq.s32.totalorder %s34, 0
      %p181 = por %p179, %p180
      %p182 = scmp.ne.s32.totalorder %s170, %s171
      %p183 = scmp.eq.s32.totalorder %s35, 1
      %p184 = por %p182, %p183
      %p186 = scmp.ne.s32.totalorder %s171, %s185
      %p187 = scmp.eq.s32.totalorder %s35, 0
      %p188 = por %p186, %p187
      %s190 = sadd.s32 %s189, 1
      %p193 = scmp.eq.s32.totalorder %s29, 1
      %p194 = scmp.ne.s32.totalorder %s189, %s191
      %p195 = scmp.eq.s32.totalorder %s29, 0
      %p196 = por %p194, %p195
      %p197 = scmp.ne.s32.totalorder %s189, %s191
      %p198 = scmp.eq.s32.totalorder %s34, 1
      %p199 = por %p197, %p198
      %p200 = scmp.ne.s32.totalorder %s191, %s192
      %p201 = scmp.eq.s32.totalorder %s34, 0
      %p202 = por %p200, %p201
      %p203 = scmp.ne.s32.totalorder %s191, %s192
      %p204 = scmp.eq.s32.totalorder %s35, 1
      %p205 = por %p203, %p204
      %p207 = scmp.ne.s32.totalorder %s192, %s206
      %p208 = scmp.eq.s32.totalorder %s35, 0
      %p209 = por %p207, %p208
      %s211 = sadd.s32 %s210, 1
      %p214 = scmp.eq.s32.totalorder %s29, 1
      %p215 = scmp.ne.s32.totalorder %s210, %s212
      %p216 = scmp.eq.s32.totalorder %s29, 0
      %p217 = por %p215, %p216
      %p218 = scmp.ne.s32.totalorder %s210, %s212
      %p219 = scmp.eq.s32.totalorder %s34, 1
      %p220 = por %p218, %p219
      %p221 = scmp.ne.s32.totalorder %s212, %s213
      %p222 = scmp.eq.s32.totalorder %s34, 0
      %p223 = por %p221, %p222
      %p224 = scmp.ne.s32.totalorder %s212, %s213
      %p225 = scmp.eq.s32.totalorder %s35, 1
      %p226 = por %p224, %p225
      %p228 = scmp.ne.s32.totalorder %s213, %s227
      %p229 = scmp.eq.s32.totalorder %s35, 0
      %p230 = por %p228, %p229
      %s231 = ssub.s32 %s29, %s36
      %p232 = scmp.eq.s32.totalorder %s231, 0
      %s234 = sadd.s32 %s233, 1
      %s235 = scalar_select %p232, %s233, %s234
      %p238 = pneg %p232
      %p239 = scmp.eq.s32.totalorder %s29, 1
      %p240 = por %p238, %p239
      %p241 = scmp.ne.s32.totalorder %s233, %s236
      %p242 = scmp.eq.s32.totalorder %s29, 0
      %p243 = por %p241, %p242
      %p244 = scmp.ne.s32.totalorder %s233, %s236
      %p245 = scmp.eq.s32.totalorder %s34, 1
      %p246 = por %p244, %p245
      %p247 = scmp.ne.s32.totalorder %s236, %s237
      %p248 = scmp.eq.s32.totalorder %s34, 0
      %p249 = por %p247, %p248
      %p250 = scmp.ne.s32.totalorder %s236, %s237
      %p251 = scmp.eq.s32.totalorder %s35, 1
      %p252 = por %p250, %p251
      %p254 = scmp.ne.s32.totalorder %s237, %s253
      %p255 = scmp.eq.s32.totalorder %s35, 0
      %p256 = por %p254, %p255
      %s257 = ssub.s32 %s29, %s36
      %p258 = scmp.eq.s32.totalorder %s257, 0
      %s260 = sadd.s32 %s259, 1
      %s261 = scalar_select %p258, %s259, %s260
      %p264 = pneg %p258
      %p265 = scmp.eq.s32.totalorder %s29, 1
      %p266 = por %p264, %p265
      %p267 = scmp.ne.s32.totalorder %s259, %s262
      %p268 = scmp.eq.s32.totalorder %s29, 0
      %p269 = por %p267, %p268
      %p270 = scmp.ne.s32.totalorder %s259, %s262
      %p271 = scmp.eq.s32.totalorder %s34, 1
      %p272 = por %p270, %p271
      %p273 = scmp.ne.s32.totalorder %s262, %s263
      %p274 = scmp.eq.s32.totalorder %s34, 0
      %p275 = por %p273, %p274
      %p276 = scmp.ne.s32.totalorder %s262, %s263
      %p277 = scmp.eq.s32.totalorder %s35, 1
      %p278 = por %p276, %p277
      %p280 = scmp.ne.s32.totalorder %s263, %s279
      %p281 = scmp.eq.s32.totalorder %s35, 0
      %p282 = por %p280, %p281
      %p283 = scmp.le.s32.totalorder 1, %s29
      %p284 = scmp.lt.s32.totalorder %s29, 3
      %p285 = pnand %p283, %p284
      %p286 = pneg %p285
      // Predicated region
      $region9: #{tpu_custom_call.1} parent=5 // pred_check
        _
      $region10: #{tpu_custom_call.1} parent=5 // pred_check_branch
        %288 = sbr.rel (%p285) target = $region12
      $region11: #{tpu_custom_call.1} parent=5 // pred_region
        %s289 = ssub.s32 %s29, 1
        // Predicated region
        $region13: #{tpu_custom_call.1} parent=11 // pred_check
          %p290 = pneg %p76
        $region14: #{tpu_custom_call.1} parent=11 // pred_check_branch
          %292 = sbr.rel (%p290) target = $region16
        $region15: #{tpu_custom_call.1} parent=11 // pred_region
          _
        $region16: #{tpu_custom_call.1} parent=11 // pred_fallthru
          _
        // Predicated region
        $region17: #{tpu_custom_call.1} parent=11 // pred_check
          %p293 = pneg %p97
        $region18: #{tpu_custom_call.1} parent=11 // pred_check_branch
          %295 = sbr.rel (%p293) target = $region20
        $region19: #{tpu_custom_call.1} parent=11 // pred_region
          _
        $region20: #{tpu_custom_call.1} parent=11 // pred_fallthru
          _
        // Predicated region
        $region21: #{tpu_custom_call.1} parent=11 // pred_check
          %p296 = pneg %p118
        $region22: #{tpu_custom_call.1} parent=11 // pred_check_branch
          %298 = sbr.rel (%p296) target = $region24
        $region23: #{tpu_custom_call.1} parent=11 // pred_region
          _
        $region24: #{tpu_custom_call.1} parent=11 // pred_fallthru
          _
        // Predicated region
        $region25: #{tpu_custom_call.1} parent=11 // pred_check
          %p299 = pneg %p139
        $region26: #{tpu_custom_call.1} parent=11 // pred_check_branch
          %301 = sbr.rel (%p299) target = $region28
        $region27: #{tpu_custom_call.1} parent=11 // pred_region
          %s303 = ssub.s32 2048, 2048
          %304 = vsyncadd [#allocation8], %s303
          %s305 = sshll.u32 [#allocation7], 4
          %s306 = int_to_ptr.vmem [resolvable:$true] %s305
          %311 = dma.hbm_to_vmem [thread:$0]  %s4, 2048, %s306, [#allocation8], 128, 128, 8
        $region28: #{tpu_custom_call.1} parent=11 // pred_fallthru
          _
        // Predicated region
        $region29: #{tpu_custom_call.1} parent=11 // pred_check
          %p312 = pneg %p160
        $region30: #{tpu_custom_call.1} parent=11 // pred_check_branch
          %314 = sbr.rel (%p312) target = $region32
        $region31: #{tpu_custom_call.1} parent=11 // pred_region
          _
        $region32: #{tpu_custom_call.1} parent=11 // pred_fallthru
          _
        // Predicated region
        $region33: #{tpu_custom_call.1} parent=11 // pred_check
          %p315 = pneg %p181
        $region34: #{tpu_custom_call.1} parent=11 // pred_check_branch
          %317 = sbr.rel (%p315) target = $region36
        $region35: #{tpu_custom_call.1} parent=11 // pred_region
          _
        $region36: #{tpu_custom_call.1} parent=11 // pred_fallthru
          _
        // Predicated region
        $region37: #{tpu_custom_call.1} parent=11 // pred_check
          %p318 = pneg %p202
        $region38: #{tpu_custom_call.1} parent=11 // pred_check_branch
          %320 = sbr.rel (%p318) target = $region40
        $region39: #{tpu_custom_call.1} parent=11 // pred_region
          _
        $region40: #{tpu_custom_call.1} parent=11 // pred_fallthru
          _
        // Predicated region
        $region41: #{tpu_custom_call.1} parent=11 // pred_check
          %p321 = pneg %p223
        $region42: #{tpu_custom_call.1} parent=11 // pred_check_branch
          %323 = sbr.rel (%p321) target = $region44
        $region43: #{tpu_custom_call.1} parent=11 // pred_region
          %s325 = ssub.s32 2048, 2048
          %326 = vsyncadd [#allocation8], %s325
          %s327 = sshll.u32 [#allocation9], 4
          %s328 = int_to_ptr.vmem [resolvable:$true] %s327
          %333 = dma.hbm_to_vmem [thread:$0]  %s8, 2048, %s328, [#allocation8], 128, 128, 8
        $region44: #{tpu_custom_call.1} parent=11 // pred_fallthru
          _
      $region12: #{tpu_custom_call.1} parent=5 // pred_fallthru
        _
      %p334 = scmp.lt.s32.totalorder %s29, 2
      // Predicated region
      $region45: #{tpu_custom_call.1} parent=5 // pred_check
        %p335 = pneg %p334
      $region46: #{tpu_custom_call.1} parent=5 // pred_check_branch
        %337 = sbr.rel (%p335) target = $region48
      $region47: #{tpu_custom_call.1} parent=5 // pred_region
        // Predicated region
        $region49: #{tpu_custom_call.1} parent=47 // pred_check
          %p338 = pneg %p49
        $region50: #{tpu_custom_call.1} parent=47 // pred_check_branch
          %340 = sbr.rel (%p338) target = $region52
        $region51: #{tpu_custom_call.1} parent=47 // pred_region
          %s341 = sand.u32 %s39, 1
          %s342 = scalar_lea.sflag [#allocation5], %s341
          %s343 = sand.u32 %s39, 1
          %s344 = smul.addr %s343, 256
          %s345 = scalar_lea.vmem [#allocation4], %s344
          %s346 = smul.u32 32, %s29
          %s348 = ssub.s32 4096, 4096
          %349 = vsyncadd %s342, %s348
          %s350 = smul.addr %s346, 128
          %s351 = scalar_lea.hbm %s0, %s350
          %s352 = sshll.u32 %s345, 4
          %s353 = int_to_ptr.vmem [resolvable:$true] %s352
          %358 = dma.hbm_to_vmem [thread:$0]  %s351, 4096, %s353, %s342, 128, 128, 8
        $region52: #{tpu_custom_call.1} parent=47 // pred_fallthru
          _
      $region48: #{tpu_custom_call.1} parent=5 // pred_fallthru
        _
      %p359 = scmp.le.s32.totalorder 1, %s29
      %p360 = scmp.lt.s32.totalorder %s29, 3
      %p361 = pnand %p359, %p360
      %p362 = pneg %p361
      // Predicated region
      $region53: #{tpu_custom_call.1} parent=5 // pred_check
        _
      $region54: #{tpu_custom_call.1} parent=5 // pred_check_branch
        %364 = sbr.rel (%p361) target = $region56
      $region55: #{tpu_custom_call.1} parent=5 // pred_region
        %s365 = ssub.s32 %s29, 1
        %s366 = sand.u32 %s42, 1
        %s367 = scalar_lea.sflag [#allocation5], %s366
        %s368 = sand.u32 %s42, 1
        %s369 = smul.addr %s368, 256
        %s370 = scalar_lea.vmem [#allocation4], %s369
        // Predicated region
        $region57: #{tpu_custom_call.1} parent=55 // pred_check
          %p371 = pneg %p55
        $region58: #{tpu_custom_call.1} parent=55 // pred_check_branch
          %373 = sbr.rel (%p371) target = $region60
        $region59: #{tpu_custom_call.1} parent=55 // pred_region
          %374 = dma.done %s367, 4096
        $region60: #{tpu_custom_call.1} parent=55 // pred_fallthru
          _
        // Predicated region
        $region61: #{tpu_custom_call.1} parent=55 // pred_check
          %p375 = pneg %p139
        $region62: #{tpu_custom_call.1} parent=55 // pred_check_branch
          %377 = sbr.rel (%p375) target = $region64
        $region63: #{tpu_custom_call.1} parent=55 // pred_region
          %378 = dma.done [#allocation8], 2048
        $region64: #{tpu_custom_call.1} parent=55 // pred_fallthru
          _
        // Predicated region
        $region65: #{tpu_custom_call.1} parent=55 // pred_check
          %p379 = pneg %p223
        $region66: #{tpu_custom_call.1} parent=55 // pred_check_branch
          %381 = sbr.rel (%p379) target = $region68
        $region67: #{tpu_custom_call.1} parent=55 // pred_region
          %382 = dma.done [#allocation8], 2048
        $region68: #{tpu_custom_call.1} parent=55 // pred_fallthru
          _
        %s383 = sand.u32 %s42, 1
        %s384 = scalar_lea.sflag [#allocation5], %s383
        %s385 = sand.u32 %s42, 1
        %s386 = smul.addr %s385, 256
        %s387 = scalar_lea.vmem [#allocation4], %s386
        %p388 = pneg %p55
        %p389 = pneg %p52
        %p390 = pneg %p76
        %p391 = pneg %p73
        %p392 = pneg %p97
        %p393 = pneg %p94
        %p394 = pneg %p118
        %p395 = pneg %p115
        %p396 = pneg %p139
        %p397 = pneg %p136
        %p398 = pneg %p160
        %p399 = pneg %p157
        %p400 = pneg %p181
        %p401 = pneg %p178
        %p402 = pneg %p202
        %p403 = pneg %p199
        %p404 = pneg %p223
        %p405 = pneg %p220
        %p406 = pneg %p249
        %p407 = pneg %p246
        %s408 = sand.u32 %s236, 1
        %s409 = scalar_lea.sflag [#allocation6], %s408
        %s410 = sand.u32 %s236, 1
        %s411 = smul.addr %s410, 256
        %s412 = scalar_lea.vmem [#allocation10], %s411
        %p413 = pneg %p275
        %p414 = pneg %p272
        %s415 = sand.u32 %s262, 1
        %s416 = scalar_lea.sflag [#allocation12], %s415
        %s417 = sand.u32 %s262, 1
        %s418 = smul.addr %s417, 256
        %s419 = scalar_lea.vmem [#allocation11], %s418
        %s420 = smul.u32 32, %s34
        %s421 = smul.u32 32, %s34
        %s422 = smul.u32 32, %s34
        %v423 = vld [vmem:[%s370] sm:$0xff]
        %v424 = vld [vmem:[%s370 + $0x8] sm:$0xff]
        %v425 = vld [vmem:[%s370 + $0x10] sm:$0xff]
        %v426 = vld [vmem:[%s370 + $0x18] sm:$0xff]
        %v427 = vld [vmem:[%s370 + $0x20] sm:$0xff]
        %v428 = vld [vmem:[%s370 + $0x28] sm:$0xff]
        %v429 = vld [vmem:[%s370 + $0x30] sm:$0xff]
        %v430 = vld [vmem:[%s370 + $0x38] sm:$0xff]
        %v431 = vld [vmem:[%s370 + $0x40] sm:$0xff]
        %v432 = vld [vmem:[%s370 + $0x48] sm:$0xff]
        %v433 = vld [vmem:[%s370 + $0x50] sm:$0xff]
        %v434 = vld [vmem:[%s370 + $0x58] sm:$0xff]
        %v435 = vld [vmem:[%s370 + $0x60] sm:$0xff]
        %v436 = vld [vmem:[%s370 + $0x68] sm:$0xff]
        %v437 = vld [vmem:[%s370 + $0x70] sm:$0xff]
        %v438 = vld [vmem:[%s370 + $0x78] sm:$0xff]
        %v439 = vld [vmem:[%s370 + $0x80] sm:$0xff]
        %v440 = vld [vmem:[%s370 + $0x88] sm:$0xff]
        %v441 = vld [vmem:[%s370 + $0x90] sm:$0xff]
        %v442 = vld [vmem:[%s370 + $0x98] sm:$0xff]
        %v443 = vld [vmem:[%s370 + $0xa0] sm:$0xff]
        %v444 = vld [vmem:[%s370 + $0xa8] sm:$0xff]
        %v445 = vld [vmem:[%s370 + $0xb0] sm:$0xff]
        %v446 = vld [vmem:[%s370 + $0xb8] sm:$0xff]
        %v447 = vld [vmem:[%s370 + $0xc0] sm:$0xff]
        %v448 = vld [vmem:[%s370 + $0xc8] sm:$0xff]
        %v449 = vld [vmem:[%s370 + $0xd0] sm:$0xff]
        %v450 = vld [vmem:[%s370 + $0xd8] sm:$0xff]
        %v451 = vld [vmem:[%s370 + $0xe0] sm:$0xff]
        %v452 = vld [vmem:[%s370 + $0xe8] sm:$0xff]
        %v453 = vld [vmem:[%s370 + $0xf0] sm:$0xff]
        %v454 = vld [vmem:[%s370 + $0xf8] sm:$0xff]
        %v455 = vld [vmem:[%s1] sm:$0x1]
        %v457 = vlaneseq
        %v458 = vshrl.u32 %v457, 7
        %v459 = vsub.s32 0, %v458
        %v460 = vrot.slane %v455, %v459
        %v462 = vmul.f32 %v423, %v460
        %v463 = vmul.f32 %v424, %v460
        %v464 = vmul.f32 %v425, %v460
        %v465 = vmul.f32 %v426, %v460
        %v466 = vmul.f32 %v427, %v460
        %v467 = vmul.f32 %v428, %v460
        %v468 = vmul.f32 %v429, %v460
        %v469 = vmul.f32 %v430, %v460
        %v470 = vmul.f32 %v431, %v460
        %v471 = vmul.f32 %v432, %v460
        %v472 = vmul.f32 %v433, %v460
        %v473 = vmul.f32 %v434, %v460
        %v474 = vmul.f32 %v435, %v460
        %v475 = vmul.f32 %v436, %v460
        %v476 = vmul.f32 %v437, %v460
        %v477 = vmul.f32 %v438, %v460
        %v478 = vmul.f32 %v439, %v460
        %v479 = vmul.f32 %v440, %v460
        %v480 = vmul.f32 %v441, %v460
        %v481 = vmul.f32 %v442, %v460
        %v482 = vmul.f32 %v443, %v460
        %v483 = vmul.f32 %v444, %v460
        %v484 = vmul.f32 %v445, %v460
        %v485 = vmul.f32 %v446, %v460
        %v486 = vmul.f32 %v447, %v460
        %v487 = vmul.f32 %v448, %v460
        %v488 = vmul.f32 %v449, %v460
        %v489 = vmul.f32 %v450, %v460
        %v490 = vmul.f32 %v451, %v460
        %v491 = vmul.f32 %v452, %v460
        %v492 = vmul.f32 %v453, %v460
        %v493 = vmul.f32 %v454, %v460
        %v494 = vld [vmem:[%s2] sm:$0x1]
        %v496 = vlaneseq
        %v497 = vshrl.u32 %v496, 7
        %v498 = vsub.s32 0, %v497
        %v499 = vrot.slane %v494, %v498
        %v501 = vadd.f32 %v462, %v499
        %v502 = vadd.f32 %v463, %v499
        %v503 = vadd.f32 %v464, %v499
        %v504 = vadd.f32 %v465, %v499
        %v505 = vadd.f32 %v466, %v499
        %v506 = vadd.f32 %v467, %v499
        %v507 = vadd.f32 %v468, %v499
        %v508 = vadd.f32 %v469, %v499
        %v509 = vadd.f32 %v470, %v499
        %v510 = vadd.f32 %v471, %v499
        %v511 = vadd.f32 %v472, %v499
        %v512 = vadd.f32 %v473, %v499
        %v513 = vadd.f32 %v474, %v499
        %v514 = vadd.f32 %v475, %v499
        %v515 = vadd.f32 %v476, %v499
        %v516 = vadd.f32 %v477, %v499
        %v517 = vadd.f32 %v478, %v499
        %v518 = vadd.f32 %v479, %v499
        %v519 = vadd.f32 %v480, %v499
        %v520 = vadd.f32 %v481, %v499
        %v521 = vadd.f32 %v482, %v499
        %v522 = vadd.f32 %v483, %v499
        %v523 = vadd.f32 %v484, %v499
        %v524 = vadd.f32 %v485, %v499
        %v525 = vadd.f32 %v486, %v499
        %v526 = vadd.f32 %v487, %v499
        %v527 = vadd.f32 %v488, %v499
        %v528 = vadd.f32 %v489, %v499
        %v529 = vadd.f32 %v490, %v499
        %v530 = vadd.f32 %v491, %v499
        %v531 = vadd.f32 %v492, %v499
        %v532 = vadd.f32 %v493, %v499
        %s533 = sld [smem:[#allocation2]]
        %vm534 = vcmp.ge.f32.partialorder %v501, 0.0
        %vm535 = vcmp.ge.f32.partialorder %v502, 0.0
        %vm536 = vcmp.ge.f32.partialorder %v503, 0.0
        %vm537 = vcmp.ge.f32.partialorder %v504, 0.0
        %vm538 = vcmp.ge.f32.partialorder %v505, 0.0
        %vm539 = vcmp.ge.f32.partialorder %v506, 0.0
        %vm540 = vcmp.ge.f32.partialorder %v507, 0.0
        %vm541 = vcmp.ge.f32.partialorder %v508, 0.0
        %vm542 = vcmp.ge.f32.partialorder %v509, 0.0
        %vm543 = vcmp.ge.f32.partialorder %v510, 0.0
        %vm544 = vcmp.ge.f32.partialorder %v511, 0.0
        %vm545 = vcmp.ge.f32.partialorder %v512, 0.0
        %vm546 = vcmp.ge.f32.partialorder %v513, 0.0
        %vm547 = vcmp.ge.f32.partialorder %v514, 0.0
        %vm548 = vcmp.ge.f32.partialorder %v515, 0.0
        %vm549 = vcmp.ge.f32.partialorder %v516, 0.0
        %vm550 = vcmp.ge.f32.partialorder %v517, 0.0
        %vm551 = vcmp.ge.f32.partialorder %v518, 0.0
        %vm552 = vcmp.ge.f32.partialorder %v519, 0.0
        %vm553 = vcmp.ge.f32.partialorder %v520, 0.0
        %vm554 = vcmp.ge.f32.partialorder %v521, 0.0
        %vm555 = vcmp.ge.f32.partialorder %v522, 0.0
        %vm556 = vcmp.ge.f32.partialorder %v523, 0.0
        %vm557 = vcmp.ge.f32.partialorder %v524, 0.0
        %vm558 = vcmp.ge.f32.partialorder %v525, 0.0
        %vm559 = vcmp.ge.f32.partialorder %v526, 0.0
        %vm560 = vcmp.ge.f32.partialorder %v527, 0.0
        %vm561 = vcmp.ge.f32.partialorder %v528, 0.0
        %vm562 = vcmp.ge.f32.partialorder %v529, 0.0
        %vm563 = vcmp.ge.f32.partialorder %v530, 0.0
        %vm564 = vcmp.ge.f32.partialorder %v531, 0.0
        %vm565 = vcmp.ge.f32.partialorder %v532, 0.0
        %v566 = vstv %s533
        %v567 = vmul.f32 %v566, %v501
        %v568 = vmul.f32 %v566, %v502
        %v569 = vmul.f32 %v566, %v503
        %v570 = vmul.f32 %v566, %v504
        %v571 = vmul.f32 %v566, %v505
        %v572 = vmul.f32 %v566, %v506
        %v573 = vmul.f32 %v566, %v507
        %v574 = vmul.f32 %v566, %v508
        %v575 = vmul.f32 %v566, %v509
        %v576 = vmul.f32 %v566, %v510
        %v577 = vmul.f32 %v566, %v511
        %v578 = vmul.f32 %v566, %v512
        %v579 = vmul.f32 %v566, %v513
        %v580 = vmul.f32 %v566, %v514
        %v581 = vmul.f32 %v566, %v515
        %v582 = vmul.f32 %v566, %v516
        %v583 = vmul.f32 %v566, %v517
        %v584 = vmul.f32 %v566, %v518
        %v585 = vmul.f32 %v566, %v519
        %v586 = vmul.f32 %v566, %v520
        %v587 = vmul.f32 %v566, %v521
        %v588 = vmul.f32 %v566, %v522
        %v589 = vmul.f32 %v566, %v523
        %v590 = vmul.f32 %v566, %v524
        %v591 = vmul.f32 %v566, %v525
        %v592 = vmul.f32 %v566, %v526
        %v593 = vmul.f32 %v566, %v527
        %v594 = vmul.f32 %v566, %v528
        %v595 = vmul.f32 %v566, %v529
        %v596 = vmul.f32 %v566, %v530
        %v597 = vmul.f32 %v566, %v531
        %v598 = vmul.f32 %v566, %v532
        %v599 = vsel %vm534, %v501, %v567
        %v600 = vsel %vm535, %v502, %v568
        %v601 = vsel %vm536, %v503, %v569
        %v602 = vsel %vm537, %v504, %v570
        %v603 = vsel %vm538, %v505, %v571
        %v604 = vsel %vm539, %v506, %v572
        %v605 = vsel %vm540, %v507, %v573
        %v606 = vsel %vm541, %v508, %v574
        %v607 = vsel %vm542, %v509, %v575
        %v608 = vsel %vm543, %v510, %v576
        %v609 = vsel %vm544, %v511, %v577
        %v610 = vsel %vm545, %v512, %v578
        %v611 = vsel %vm546, %v513, %v579
        %v612 = vsel %vm547, %v514, %v580
        %v613 = vsel %vm548, %v515, %v581
        %v614 = vsel %vm549, %v516, %v582
        %v615 = vsel %vm550, %v517, %v583
        %v616 = vsel %vm551, %v518, %v584
        %v617 = vsel %vm552, %v519, %v585
        %v618 = vsel %vm553, %v520, %v586
        %v619 = vsel %vm554, %v521, %v587
        %v620 = vsel %vm555, %v522, %v588
        %v621 = vsel %vm556, %v523, %v589
        %v622 = vsel %vm557, %v524, %v590
        %v623 = vsel %vm558, %v525, %v591
        %v624 = vsel %vm559, %v526, %v592
        %v625 = vsel %vm560, %v527, %v593
        %v626 = vsel %vm561, %v528, %v594
        %v627 = vsel %vm562, %v529, %v595
        %v628 = vsel %vm563, %v530, %v596
        %v629 = vsel %vm564, %v531, %v597
        %v630 = vsel %vm565, %v532, %v598
        %v631 = vld [vmem:[%s5] sm:$0x1]
        %v633 = vlaneseq
        %v634 = vshrl.u32 %v633, 7
        %v635 = vsub.s32 0, %v634
        %v636 = vrot.slane %v631, %v635
        %v638 = vmul.f32 %v423, %v636
        %v639 = vmul.f32 %v424, %v636
        %v640 = vmul.f32 %v425, %v636
        %v641 = vmul.f32 %v426, %v636
        %v642 = vmul.f32 %v427, %v636
        %v643 = vmul.f32 %v428, %v636
        %v644 = vmul.f32 %v429, %v636
        %v645 = vmul.f32 %v430, %v636
        %v646 = vmul.f32 %v431, %v636
        %v647 = vmul.f32 %v432, %v636
        %v648 = vmul.f32 %v433, %v636
        %v649 = vmul.f32 %v434, %v636
        %v650 = vmul.f32 %v435, %v636
        %v651 = vmul.f32 %v436, %v636
        %v652 = vmul.f32 %v437, %v636
        %v653 = vmul.f32 %v438, %v636
        %v654 = vmul.f32 %v439, %v636
        %v655 = vmul.f32 %v440, %v636
        %v656 = vmul.f32 %v441, %v636
        %v657 = vmul.f32 %v442, %v636
        %v658 = vmul.f32 %v443, %v636
        %v659 = vmul.f32 %v444, %v636
        %v660 = vmul.f32 %v445, %v636
        %v661 = vmul.f32 %v446, %v636
        %v662 = vmul.f32 %v447, %v636
        %v663 = vmul.f32 %v448, %v636
        %v664 = vmul.f32 %v449, %v636
        %v665 = vmul.f32 %v450, %v636
        %v666 = vmul.f32 %v451, %v636
        %v667 = vmul.f32 %v452, %v636
        %v668 = vmul.f32 %v453, %v636
        %v669 = vmul.f32 %v454, %v636
        %v670 = vld [vmem:[%s6] sm:$0x1]
        %v672 = vlaneseq
        %v673 = vshrl.u32 %v672, 7
        %v674 = vsub.s32 0, %v673
        %v675 = vrot.slane %v670, %v674
        %v677 = vadd.f32 %v638, %v675
        %v678 = vadd.f32 %v639, %v675
        %v679 = vadd.f32 %v640, %v675
        %v680 = vadd.f32 %v641, %v675
        %v681 = vadd.f32 %v642, %v675
        %v682 = vadd.f32 %v643, %v675
        %v683 = vadd.f32 %v644, %v675
        %v684 = vadd.f32 %v645, %v675
        %v685 = vadd.f32 %v646, %v675
        %v686 = vadd.f32 %v647, %v675
        %v687 = vadd.f32 %v648, %v675
        %v688 = vadd.f32 %v649, %v675
        %v689 = vadd.f32 %v650, %v675
        %v690 = vadd.f32 %v651, %v675
        %v691 = vadd.f32 %v652, %v675
        %v692 = vadd.f32 %v653, %v675
        %v693 = vadd.f32 %v654, %v675
        %v694 = vadd.f32 %v655, %v675
        %v695 = vadd.f32 %v656, %v675
        %v696 = vadd.f32 %v657, %v675
        %v697 = vadd.f32 %v658, %v675
        %v698 = vadd.f32 %v659, %v675
        %v699 = vadd.f32 %v660, %v675
        %v700 = vadd.f32 %v661, %v675
        %v701 = vadd.f32 %v662, %v675
        %v702 = vadd.f32 %v663, %v675
        %v703 = vadd.f32 %v664, %v675
        %v704 = vadd.f32 %v665, %v675
        %v705 = vadd.f32 %v666, %v675
        %v706 = vadd.f32 %v667, %v675
        %v707 = vadd.f32 %v668, %v675
        %v708 = vadd.f32 %v669, %v675
        %s709 = sld [smem:[#allocation3]]
        %vm710 = vcmp.ge.f32.partialorder %v677, 0.0
        %vm711 = vcmp.ge.f32.partialorder %v678, 0.0
        %vm712 = vcmp.ge.f32.partialorder %v679, 0.0
        %vm713 = vcmp.ge.f32.partialorder %v680, 0.0
        %vm714 = vcmp.ge.f32.partialorder %v681, 0.0
        %vm715 = vcmp.ge.f32.partialorder %v682, 0.0
        %vm716 = vcmp.ge.f32.partialorder %v683, 0.0
        %vm717 = vcmp.ge.f32.partialorder %v684, 0.0
        %vm718 = vcmp.ge.f32.partialorder %v685, 0.0
        %vm719 = vcmp.ge.f32.partialorder %v686, 0.0
        %vm720 = vcmp.ge.f32.partialorder %v687, 0.0
        %vm721 = vcmp.ge.f32.partialorder %v688, 0.0
        %vm722 = vcmp.ge.f32.partialorder %v689, 0.0
        %vm723 = vcmp.ge.f32.partialorder %v690, 0.0
        %vm724 = vcmp.ge.f32.partialorder %v691, 0.0
        %vm725 = vcmp.ge.f32.partialorder %v692, 0.0
        %vm726 = vcmp.ge.f32.partialorder %v693, 0.0
        %vm727 = vcmp.ge.f32.partialorder %v694, 0.0
        %vm728 = vcmp.ge.f32.partialorder %v695, 0.0
        %vm729 = vcmp.ge.f32.partialorder %v696, 0.0
        %vm730 = vcmp.ge.f32.partialorder %v697, 0.0
        %vm731 = vcmp.ge.f32.partialorder %v698, 0.0
        %vm732 = vcmp.ge.f32.partialorder %v699, 0.0
        %vm733 = vcmp.ge.f32.partialorder %v700, 0.0
        %vm734 = vcmp.ge.f32.partialorder %v701, 0.0
        %vm735 = vcmp.ge.f32.partialorder %v702, 0.0
        %vm736 = vcmp.ge.f32.partialorder %v703, 0.0
        %vm737 = vcmp.ge.f32.partialorder %v704, 0.0
        %vm738 = vcmp.ge.f32.partialorder %v705, 0.0
        %vm739 = vcmp.ge.f32.partialorder %v706, 0.0
        %vm740 = vcmp.ge.f32.partialorder %v707, 0.0
        %vm741 = vcmp.ge.f32.partialorder %v708, 0.0
        %v742 = vstv %s709
        %v743 = vmul.f32 %v742, %v677
        %v744 = vmul.f32 %v742, %v678
        %v745 = vmul.f32 %v742, %v679
        %v746 = vmul.f32 %v742, %v680
        %v747 = vmul.f32 %v742, %v681
        %v748 = vmul.f32 %v742, %v682
        %v749 = vmul.f32 %v742, %v683
        %v750 = vmul.f32 %v742, %v684
        %v751 = vmul.f32 %v742, %v685
        %v752 = vmul.f32 %v742, %v686
        %v753 = vmul.f32 %v742, %v687
        %v754 = vmul.f32 %v742, %v688
        %v755 = vmul.f32 %v742, %v689
        %v756 = vmul.f32 %v742, %v690
        %v757 = vmul.f32 %v742, %v691
        %v758 = vmul.f32 %v742, %v692
        %v759 = vmul.f32 %v742, %v693
        %v760 = vmul.f32 %v742, %v694
        %v761 = vmul.f32 %v742, %v695
        %v762 = vmul.f32 %v742, %v696
        %v763 = vmul.f32 %v742, %v697
        %v764 = vmul.f32 %v742, %v698
        %v765 = vmul.f32 %v742, %v699
        %v766 = vmul.f32 %v742, %v700
        %v767 = vmul.f32 %v742, %v701
        %v768 = vmul.f32 %v742, %v702
        %v769 = vmul.f32 %v742, %v703
        %v770 = vmul.f32 %v742, %v704
        %v771 = vmul.f32 %v742, %v705
        %v772 = vmul.f32 %v742, %v706
        %v773 = vmul.f32 %v742, %v707
        %v774 = vmul.f32 %v742, %v708
        %v775 = vsel %vm710, %v677, %v743
        %v776 = vsel %vm711, %v678, %v744
        %v777 = vsel %vm712, %v679, %v745
        %v778 = vsel %vm713, %v680, %v746
        %v779 = vsel %vm714, %v681, %v747
        %v780 = vsel %vm715, %v682, %v748
        %v781 = vsel %vm716, %v683, %v749
        %v782 = vsel %vm717, %v684, %v750
        %v783 = vsel %vm718, %v685, %v751
        %v784 = vsel %vm719, %v686, %v752
        %v785 = vsel %vm720, %v687, %v753
        %v786 = vsel %vm721, %v688, %v754
        %v787 = vsel %vm722, %v689, %v755
        %v788 = vsel %vm723, %v690, %v756
        %v789 = vsel %vm724, %v691, %v757
        %v790 = vsel %vm725, %v692, %v758
        %v791 = vsel %vm726, %v693, %v759
        %v792 = vsel %vm727, %v694, %v760
        %v793 = vsel %vm728, %v695, %v761
        %v794 = vsel %vm729, %v696, %v762
        %v795 = vsel %vm730, %v697, %v763
        %v796 = vsel %vm731, %v698, %v764
        %v797 = vsel %vm732, %v699, %v765
        %v798 = vsel %vm733, %v700, %v766
        %v799 = vsel %vm734, %v701, %v767
        %v800 = vsel %vm735, %v702, %v768
        %v801 = vsel %vm736, %v703, %v769
        %v802 = vsel %vm737, %v704, %v770
        %v803 = vsel %vm738, %v705, %v771
        %v804 = vsel %vm739, %v706, %v772
        %v805 = vsel %vm740, %v707, %v773
        %v806 = vsel %vm741, %v708, %v774
        %v807 = vld [vmem:[#allocation7] sm:$0xff]
        %v808 = vld [vmem:[#allocation7 + $0x8] sm:$0xff]
        %v809 = vld [vmem:[#allocation7 + $0x10] sm:$0xff]
        %v810 = vld [vmem:[#allocation7 + $0x18] sm:$0xff]
        %v811 = vld [vmem:[#allocation7 + $0x20] sm:$0xff]
        %v812 = vld [vmem:[#allocation7 + $0x28] sm:$0xff]
        %v813 = vld [vmem:[#allocation7 + $0x30] sm:$0xff]
        %v814 = vld [vmem:[#allocation7 + $0x38] sm:$0xff]
        %v815 = vld [vmem:[#allocation7 + $0x40] sm:$0xff]
        %v816 = vld [vmem:[#allocation7 + $0x48] sm:$0xff]
        %v817 = vld [vmem:[#allocation7 + $0x50] sm:$0xff]
        %v818 = vld [vmem:[#allocation7 + $0x58] sm:$0xff]
        %v819 = vld [vmem:[#allocation7 + $0x60] sm:$0xff]
        %v820 = vld [vmem:[#allocation7 + $0x68] sm:$0xff]
        %v821 = vld [vmem:[#allocation7 + $0x70] sm:$0xff]
        %v822 = vld [vmem:[#allocation7 + $0x78] sm:$0xff]
        %823 = vmatprep.subr.mxu0 0.0
        %824 = vmatpush1.msra.mxu0 %v807
        %825 = vmatprep.subr.mxu0 0.0
        %826 = vmatpush1.msra.mxu0 %v808
        %827 = vmatprep.subr.mxu0 0.0
        %828 = vmatpush1.msra.mxu0 %v809
        %829 = vmatprep.subr.mxu0 0.0
        %830 = vmatpush1.msra.mxu0 %v810
        %831 = vmatprep.subr.mxu0 0.0
        %832 = vmatpush1.msra.mxu0 %v811
        %833 = vmatprep.subr.mxu0 0.0
        %834 = vmatpush1.msra.mxu0 %v812
        %835 = vmatprep.subr.mxu0 0.0
        %836 = vmatpush1.msra.mxu0 %v813
        %837 = vmatprep.subr.mxu0 0.0
        %838 = vmatpush1.msra.mxu0 %v814
        %839 = vmatprep.subr.mxu0 0.0
        %840 = vmatpush1.msra.mxu0 %v815
        %841 = vmatprep.subr.mxu0 0.0
        %842 = vmatpush1.msra.mxu0 %v816
        %843 = vmatprep.subr.mxu0 0.0
        %844 = vmatpush1.msra.mxu0 %v817
        %845 = vmatprep.subr.mxu0 0.0
        %846 = vmatpush1.msra.mxu0 %v818
        %847 = vmatprep.subr.mxu0 0.0
        %848 = vmatpush1.msra.mxu0 %v819
        %849 = vmatprep.subr.mxu0 0.0
        %850 = vmatpush1.msra.mxu0 %v820
        %851 = vmatprep.subr.mxu0 0.0
        %852 = vmatpush1.msra.mxu0 %v821
        %853 = vmatprep.subr.mxu0 0.0
        %854 = vmatpush1.msra.mxu0 %v822
        %855 = vmatprep.subr.mxu0 0.0
        %856 = vmatpush1.msra.mxu0 0.0
        %857 = vmatprep.subr.mxu0 0.0
        %858 = vmatpush1.msra.mxu0 0.0
        %859 = vmatprep.subr.mxu0 0.0
        %860 = vmatpush1.msra.mxu0 0.0
        %861 = vmatprep.subr.mxu0 0.0
        %862 = vmatpush1.msra.mxu0 0.0
        %863 = vmatprep.subr.mxu0 0.0
        %864 = vmatpush1.msra.mxu0 0.0
        %865 = vmatprep.subr.mxu0 0.0
        %866 = vmatpush1.msra.mxu0 0.0
        %867 = vmatprep.subr.mxu0 0.0
        %868 = vmatpush1.msra.mxu0 0.0
        %869 = vmatprep.subr.mxu0 0.0
        %870 = vmatpush1.msra.mxu0 0.0
        %871 = vmatprep.subr.mxu0 0.0
        %872 = vmatpush1.msra.mxu0 0.0
        %873 = vmatprep.subr.mxu0 0.0
        %874 = vmatpush1.msra.mxu0 0.0
        %875 = vmatprep.subr.mxu0 0.0
        %876 = vmatpush1.msra.mxu0 0.0
        %877 = vmatprep.subr.mxu0 0.0
        %878 = vmatpush1.msra.mxu0 0.0
        %879 = vmatprep.subr.mxu0 0.0
        %880 = vmatpush1.msra.mxu0 0.0
        %881 = vmatprep.subr.mxu0 0.0
        %882 = vmatpush1.msra.mxu0 0.0
        %883 = vmatprep.subr.mxu0 0.0
        %884 = vmatpush1.msra.mxu0 0.0
        %885 = vmatprep.subr.mxu0 0.0
        %886 = vmatpush1.msra.mxu0 0.0
        %887 = vmatprep.mubr.f32.mxu0 0.0
        %888 = vmatmul.mubr.f32.gmra.mrb[0].mxu0 %v599
        %v889 = vpop.f32.mrb[0].mxu0
        %v890 = vadd.f32 0.0, %v889
        %v891 = vpop.f32.mrb[0].mxu0
        %892 = vmatprep.mubr.f32.mxu0 0.0
        %893 = vmatmul.mubr.f32.gmra.mrb[0].mxu0 %v600
        %v894 = vpop.f32.mrb[0].mxu0
        %v895 = vadd.f32 0.0, %v894
        %v896 = vpop.f32.mrb[0].mxu0
        %897 = vmatprep.mubr.f32.mxu0 0.0
        %898 = vmatmul.mubr.f32.gmra.mrb[0].mxu0 %v601
        %v899 = vpop.f32.mrb[0].mxu0
        %v900 = vadd.f32 0.0, %v899
        %v901 = vpop.f32.mrb[0].mxu0
        %902 = vmatprep.mubr.f32.mxu0 0.0
        %903 = vmatmul.mubr.f32.gmra.mrb[0].mxu0 %v602
        %v904 = vpop.f32.mrb[0].mxu0
        %v905 = vadd.f32 0.0, %v904
        %v906 = vpop.f32.mrb[0].mxu0
        %907 = vmatprep.mubr.f32.mxu0 0.0
        %908 = vmatmul.mubr.f32.gmra.mrb[0].mxu0 %v603
        %v909 = vpop.f32.mrb[0].mxu0
        %v910 = vadd.f32 0.0, %v909
        %v911 = vpop.f32.mrb[0].mxu0
        %912 = vmatprep.mubr.f32.mxu0 0.0
        %913 = vmatmul.mubr.f32.gmra.mrb[0].mxu0 %v604
        %v914 = vpop.f32.mrb[0].mxu0
        %v915 = vadd.f32 0.0, %v914
        %v916 = vpop.f32.mrb[0].mxu0
        %917 = vmatprep.mubr.f32.mxu0 0.0
        %918 = vmatmul.mubr.f32.gmra.mrb[0].mxu0 %v605
        %v919 = vpop.f32.mrb[0].mxu0
        %v920 = vadd.f32 0.0, %v919
        %v921 = vpop.f32.mrb[0].mxu0
        %922 = vmatprep.mubr.f32.mxu0 0.0
        %923 = vmatmul.mubr.f32.gmra.mrb[0].mxu0 %v606
        %v924 = vpop.f32.mrb[0].mxu0
        %v925 = vadd.f32 0.0, %v924
        %v926 = vpop.f32.mrb[0].mxu0
        %927 = vmatprep.mubr.f32.mxu0 0.0
        %928 = vmatmul.mubr.f32.gmra.mrb[0].mxu0 %v607
        %v929 = vpop.f32.mrb[0].mxu0
        %v930 = vadd.f32 0.0, %v929
        %v931 = vpop.f32.mrb[0].mxu0
        %932 = vmatprep.mubr.f32.mxu0 0.0
        %933 = vmatmul.mubr.f32.gmra.mrb[0].mxu0 %v608
        %v934 = vpop.f32.mrb[0].mxu0
        %v935 = vadd.f32 0.0, %v934
        %v936 = vpop.f32.mrb[0].mxu0
        %937 = vmatprep.mubr.f32.mxu0 0.0
        %938 = vmatmul.mubr.f32.gmra.mrb[0].mxu0 %v609
        %v939 = vpop.f32.mrb[0].mxu0
        %v940 = vadd.f32 0.0, %v939
        %v941 = vpop.f32.mrb[0].mxu0
        %942 = vmatprep.mubr.f32.mxu0 0.0
        %943 = vmatmul.mubr.f32.gmra.mrb[0].mxu0 %v610
        %v944 = vpop.f32.mrb[0].mxu0
        %v945 = vadd.f32 0.0, %v944
        %v946 = vpop.f32.mrb[0].mxu0
        %947 = vmatprep.mubr.f32.mxu0 0.0
        %948 = vmatmul.mubr.f32.gmra.mrb[0].mxu0 %v611
        %v949 = vpop.f32.mrb[0].mxu0
        %v950 = vadd.f32 0.0, %v949
        %v951 = vpop.f32.mrb[0].mxu0
        %952 = vmatprep.mubr.f32.mxu0 0.0
        %953 = vmatmul.mubr.f32.gmra.mrb[0].mxu0 %v612
        %v954 = vpop.f32.mrb[0].mxu0
        %v955 = vadd.f32 0.0, %v954
        %v956 = vpop.f32.mrb[0].mxu0
        %957 = vmatprep.mubr.f32.mxu0 0.0
        %958 = vmatmul.mubr.f32.gmra.mrb[0].mxu0 %v613
        %v959 = vpop.f32.mrb[0].mxu0
        %v960 = vadd.f32 0.0, %v959
        %v961 = vpop.f32.mrb[0].mxu0
        %962 = vmatprep.mubr.f32.mxu0 0.0
        %963 = vmatmul.mubr.f32.gmra.mrb[0].mxu0 %v614
        %v964 = vpop.f32.mrb[0].mxu0
        %v965 = vadd.f32 0.0, %v964
        %v966 = vpop.f32.mrb[0].mxu0
        %967 = vmatprep.mubr.f32.mxu0 0.0
        %968 = vmatmul.mubr.f32.gmra.mrb[0].mxu0 %v615
        %v969 = vpop.f32.mrb[0].mxu0
        %v970 = vadd.f32 0.0, %v969
        %v971 = vpop.f32.mrb[0].mxu0
        %972 = vmatprep.mubr.f32.mxu0 0.0
        %973 = vmatmul.mubr.f32.gmra.mrb[0].mxu0 %v616
        %v974 = vpop.f32.mrb[0].mxu0
        %v975 = vadd.f32 0.0, %v974
        %v976 = vpop.f32.mrb[0].mxu0
        %977 = vmatprep.mubr.f32.mxu0 0.0
        %978 = vmatmul.mubr.f32.gmra.mrb[0].mxu0 %v617
        %v979 = vpop.f32.mrb[0].mxu0
        %v980 = vadd.f32 0.0, %v979
        %v981 = vpop.f32.mrb[0].mxu0
        %982 = vmatprep.mubr.f32.mxu0 0.0
        %983 = vmatmul.mubr.f32.gmra.mrb[0].mxu0 %v618
        %v984 = vpop.f32.mrb[0].mxu0
        %v985 = vadd.f32 0.0, %v984
        %v986 = vpop.f32.mrb[0].mxu0
        %987 = vmatprep.mubr.f32.mxu0 0.0
        %988 = vmatmul.mubr.f32.gmra.mrb[0].mxu0 %v619
        %v989 = vpop.f32.mrb[0].mxu0
        %v990 = vadd.f32 0.0, %v989
        %v991 = vpop.f32.mrb[0].mxu0
        %992 = vmatprep.mubr.f32.mxu0 0.0
        %993 = vmatmul.mubr.f32.gmra.mrb[0].mxu0 %v620
        %v994 = vpop.f32.mrb[0].mxu0
        %v995 = vadd.f32 0.0, %v994
        %v996 = vpop.f32.mrb[0].mxu0
        %997 = vmatprep.mubr.f32.mxu0 0.0
        %998 = vmatmul.mubr.f32.gmra.mrb[0].mxu0 %v621
        %v999 = vpop.f32.mrb[0].mxu0
        %v1000 = vadd.f32 0.0, %v999
        %v1001 = vpop.f32.mrb[0].mxu0
        %1002 = vmatprep.mubr.f32.mxu0 0.0
        %1003 = vmatmul.mubr.f32.gmra.mrb[0].mxu0 %v622
        %v1004 = vpop.f32.mrb[0].mxu0
        %v1005 = vadd.f32 0.0, %v1004
        %v1006 = vpop.f32.mrb[0].mxu0
        %1007 = vmatprep.mubr.f32.mxu0 0.0
        %1008 = vmatmul.mubr.f32.gmra.mrb[0].mxu0 %v623
        %v1009 = vpop.f32.mrb[0].mxu0
        %v1010 = vadd.f32 0.0, %v1009
        %v1011 = vpop.f32.mrb[0].mxu0
        %1012 = vmatprep.mubr.f32.mxu0 0.0
        %1013 = vmatmul.mubr.f32.gmra.mrb[0].mxu0 %v624
        %v1014 = vpop.f32.mrb[0].mxu0
        %v1015 = vadd.f32 0.0, %v1014
        %v1016 = vpop.f32.mrb[0].mxu0
        %1017 = vmatprep.mubr.f32.mxu0 0.0
        %1018 = vmatmul.mubr.f32.gmra.mrb[0].mxu0 %v625
        %v1019 = vpop.f32.mrb[0].mxu0
        %v1020 = vadd.f32 0.0, %v1019
        %v1021 = vpop.f32.mrb[0].mxu0
        %1022 = vmatprep.mubr.f32.mxu0 0.0
        %1023 = vmatmul.mubr.f32.gmra.mrb[0].mxu0 %v626
        %v1024 = vpop.f32.mrb[0].mxu0
        %v1025 = vadd.f32 0.0, %v1024
        %v1026 = vpop.f32.mrb[0].mxu0
        %1027 = vmatprep.mubr.f32.mxu0 0.0
        %1028 = vmatmul.mubr.f32.gmra.mrb[0].mxu0 %v627
        %v1029 = vpop.f32.mrb[0].mxu0
        %v1030 = vadd.f32 0.0, %v1029
        %v1031 = vpop.f32.mrb[0].mxu0
        %1032 = vmatprep.mubr.f32.mxu0 0.0
        %1033 = vmatmul.mubr.f32.gmra.mrb[0].mxu0 %v628
        %v1034 = vpop.f32.mrb[0].mxu0
        %v1035 = vadd.f32 0.0, %v1034
        %v1036 = vpop.f32.mrb[0].mxu0
        %1037 = vmatprep.mubr.f32.mxu0 0.0
        %1038 = vmatmul.mubr.f32.gmra.mrb[0].mxu0 %v629
        %v1039 = vpop.f32.mrb[0].mxu0
        %v1040 = vadd.f32 0.0, %v1039
        %v1041 = vpop.f32.mrb[0].mxu0
        %1042 = vmatprep.mubr.f32.mxu0 0.0
        %1043 = vmatmul.mubr.f32.gmra.mrb[0].mxu0 %v630
        %v1044 = vpop.f32.mrb[0].mxu0
        %v1045 = vadd.f32 0.0, %v1044
        %v1046 = vpop.f32.mrb[0].mxu0
        %1047 = vdwg.mxu0
        %1048 = vst [vmem:[%s412] sm:$0xff] %v890
        %1049 = vst [vmem:[%s412 + $0x8] sm:$0xff] %v895
        %1050 = vst [vmem:[%s412 + $0x10] sm:$0xff] %v900
        %1051 = vst [vmem:[%s412 + $0x18] sm:$0xff] %v905
        %1052 = vst [vmem:[%s412 + $0x20] sm:$0xff] %v910
        %1053 = vst [vmem:[%s412 + $0x28] sm:$0xff] %v915
        %1054 = vst [vmem:[%s412 + $0x30] sm:$0xff] %v920
        %1055 = vst [vmem:[%s412 + $0x38] sm:$0xff] %v925
        %1056 = vst [vmem:[%s412 + $0x40] sm:$0xff] %v930
        %1057 = vst [vmem:[%s412 + $0x48] sm:$0xff] %v935
        %1058 = vst [vmem:[%s412 + $0x50] sm:$0xff] %v940
        %1059 = vst [vmem:[%s412 + $0x58] sm:$0xff] %v945
        %1060 = vst [vmem:[%s412 + $0x60] sm:$0xff] %v950
        %1061 = vst [vmem:[%s412 + $0x68] sm:$0xff] %v955
        %1062 = vst [vmem:[%s412 + $0x70] sm:$0xff] %v960
        %1063 = vst [vmem:[%s412 + $0x78] sm:$0xff] %v965
        %1064 = vst [vmem:[%s412 + $0x80] sm:$0xff] %v970
        %1065 = vst [vmem:[%s412 + $0x88] sm:$0xff] %v975
        %1066 = vst [vmem:[%s412 + $0x90] sm:$0xff] %v980
        %1067 = vst [vmem:[%s412 + $0x98] sm:$0xff] %v985
        %1068 = vst [vmem:[%s412 + $0xa0] sm:$0xff] %v990
        %1069 = vst [vmem:[%s412 + $0xa8] sm:$0xff] %v995
        %1070 = vst [vmem:[%s412 + $0xb0] sm:$0xff] %v1000
        %1071 = vst [vmem:[%s412 + $0xb8] sm:$0xff] %v1005
        %1072 = vst [vmem:[%s412 + $0xc0] sm:$0xff] %v1010
        %1073 = vst [vmem:[%s412 + $0xc8] sm:$0xff] %v1015
        %1074 = vst [vmem:[%s412 + $0xd0] sm:$0xff] %v1020
        %1075 = vst [vmem:[%s412 + $0xd8] sm:$0xff] %v1025
        %1076 = vst [vmem:[%s412 + $0xe0] sm:$0xff] %v1030
        %1077 = vst [vmem:[%s412 + $0xe8] sm:$0xff] %v1035
        %1078 = vst [vmem:[%s412 + $0xf0] sm:$0xff] %v1040
        %1079 = vst [vmem:[%s412 + $0xf8] sm:$0xff] %v1045
        %v1080 = vld [vmem:[#allocation9] sm:$0xff]
        %v1081 = vld [vmem:[#allocation9 + $0x8] sm:$0xff]
        %v1082 = vld [vmem:[#allocation9 + $0x10] sm:$0xff]
        %v1083 = vld [vmem:[#allocation9 + $0x18] sm:$0xff]
        %v1084 = vld [vmem:[#allocation9 + $0x20] sm:$0xff]
        %v1085 = vld [vmem:[#allocation9 + $0x28] sm:$0xff]
        %v1086 = vld [vmem:[#allocation9 + $0x30] sm:$0xff]
        %v1087 = vld [vmem:[#allocation9 + $0x38] sm:$0xff]
        %v1088 = vld [vmem:[#allocation9 + $0x40] sm:$0xff]
        %v1089 = vld [vmem:[#allocation9 + $0x48] sm:$0xff]
        %v1090 = vld [vmem:[#allocation9 + $0x50] sm:$0xff]
        %v1091 = vld [vmem:[#allocation9 + $0x58] sm:$0xff]
        %v1092 = vld [vmem:[#allocation9 + $0x60] sm:$0xff]
        %v1093 = vld [vmem:[#allocation9 + $0x68] sm:$0xff]
        %v1094 = vld [vmem:[#allocation9 + $0x70] sm:$0xff]
        %v1095 = vld [vmem:[#allocation9 + $0x78] sm:$0xff]
        %1096 = vmatprep.subr.mxu0 0.0
        %1097 = vmatpush1.msra.mxu0 %v1080
        %1098 = vmatprep.subr.mxu0 0.0
        %1099 = vmatpush1.msra.mxu0 %v1081
        %1100 = vmatprep.subr.mxu0 0.0
        %1101 = vmatpush1.msra.mxu0 %v1082
        %1102 = vmatprep.subr.mxu0 0.0
        %1103 = vmatpush1.msra.mxu0 %v1083
        %1104 = vmatprep.subr.mxu0 0.0
        %1105 = vmatpush1.msra.mxu0 %v1084
        %1106 = vmatprep.subr.mxu0 0.0
        %1107 = vmatpush1.msra.mxu0 %v1085
        %1108 = vmatprep.subr.mxu0 0.0
        %1109 = vmatpush1.msra.mxu0 %v1086
        %1110 = vmatprep.subr.mxu0 0.0
        %1111 = vmatpush1.msra.mxu0 %v1087
        %1112 = vmatprep.subr.mxu0 0.0
        %1113 = vmatpush1.msra.mxu0 %v1088
        %1114 = vmatprep.subr.mxu0 0.0
        %1115 = vmatpush1.msra.mxu0 %v1089
        %1116 = vmatprep.subr.mxu0 0.0
        %1117 = vmatpush1.msra.mxu0 %v1090
        %1118 = vmatprep.subr.mxu0 0.0
        %1119 = vmatpush1.msra.mxu0 %v1091
        %1120 = vmatprep.subr.mxu0 0.0
        %1121 = vmatpush1.msra.mxu0 %v1092
        %1122 = vmatprep.subr.mxu0 0.0
        %1123 = vmatpush1.msra.mxu0 %v1093
        %1124 = vmatprep.subr.mxu0 0.0
        %1125 = vmatpush1.msra.mxu0 %v1094
        %1126 = vmatprep.subr.mxu0 0.0
        %1127 = vmatpush1.msra.mxu0 %v1095
        %1128 = vmatprep.subr.mxu0 0.0
        %1129 = vmatpush1.msra.mxu0 0.0
        %1130 = vmatprep.subr.mxu0 0.0
        %1131 = vmatpush1.msra.mxu0 0.0
        %1132 = vmatprep.subr.mxu0 0.0
        %1133 = vmatpush1.msra.mxu0 0.0
        %1134 = vmatprep.subr.mxu0 0.0
        %1135 = vmatpush1.msra.mxu0 0.0
        %1136 = vmatprep.subr.mxu0 0.0
        %1137 = vmatpush1.msra.mxu0 0.0
        %1138 = vmatprep.subr.mxu0 0.0
        %1139 = vmatpush1.msra.mxu0 0.0
        %1140 = vmatprep.subr.mxu0 0.0
        %1141 = vmatpush1.msra.mxu0 0.0
        %1142 = vmatprep.subr.mxu0 0.0
        %1143 = vmatpush1.msra.mxu0 0.0
        %1144 = vmatprep.subr.mxu0 0.0
        %1145 = vmatpush1.msra.mxu0 0.0
        %1146 = vmatprep.subr.mxu0 0.0
        %1147 = vmatpush1.msra.mxu0 0.0
        %1148 = vmatprep.subr.mxu0 0.0
        %1149 = vmatpush1.msra.mxu0 0.0
        %1150 = vmatprep.subr.mxu0 0.0
        %1151 = vmatpush1.msra.mxu0 0.0
        %1152 = vmatprep.subr.mxu0 0.0
        %1153 = vmatpush1.msra.mxu0 0.0
        %1154 = vmatprep.subr.mxu0 0.0
        %1155 = vmatpush1.msra.mxu0 0.0
        %1156 = vmatprep.subr.mxu0 0.0
        %1157 = vmatpush1.msra.mxu0 0.0
        %1158 = vmatprep.subr.mxu0 0.0
        %1159 = vmatpush1.msra.mxu0 0.0
        %1160 = vmatprep.mubr.f32.mxu0 0.0
        %1161 = vmatmul.mubr.f32.gmra.mrb[0].mxu0 %v775
        %v1162 = vpop.f32.mrb[0].mxu0
        %v1163 = vadd.f32 0.0, %v1162
        %v1164 = vpop.f32.mrb[0].mxu0
        %1165 = vmatprep.mubr.f32.mxu0 0.0
        %1166 = vmatmul.mubr.f32.gmra.mrb[0].mxu0 %v776
        %v1167 = vpop.f32.mrb[0].mxu0
        %v1168 = vadd.f32 0.0, %v1167
        %v1169 = vpop.f32.mrb[0].mxu0
        %1170 = vmatprep.mubr.f32.mxu0 0.0
        %1171 = vmatmul.mubr.f32.gmra.mrb[0].mxu0 %v777
        %v1172 = vpop.f32.mrb[0].mxu0
        %v1173 = vadd.f32 0.0, %v1172
        %v1174 = vpop.f32.mrb[0].mxu0
        %1175 = vmatprep.mubr.f32.mxu0 0.0
        %1176 = vmatmul.mubr.f32.gmra.mrb[0].mxu0 %v778
        %v1177 = vpop.f32.mrb[0].mxu0
        %v1178 = vadd.f32 0.0, %v1177
        %v1179 = vpop.f32.mrb[0].mxu0
        %1180 = vmatprep.mubr.f32.mxu0 0.0
        %1181 = vmatmul.mubr.f32.gmra.mrb[0].mxu0 %v779
        %v1182 = vpop.f32.mrb[0].mxu0
        %v1183 = vadd.f32 0.0, %v1182
        %v1184 = vpop.f32.mrb[0].mxu0
        %1185 = vmatprep.mubr.f32.mxu0 0.0
        %1186 = vmatmul.mubr.f32.gmra.mrb[0].mxu0 %v780
        %v1187 = vpop.f32.mrb[0].mxu0
        %v1188 = vadd.f32 0.0, %v1187
        %v1189 = vpop.f32.mrb[0].mxu0
        %1190 = vmatprep.mubr.f32.mxu0 0.0
        %1191 = vmatmul.mubr.f32.gmra.mrb[0].mxu0 %v781
        %v1192 = vpop.f32.mrb[0].mxu0
        %v1193 = vadd.f32 0.0, %v1192
        %v1194 = vpop.f32.mrb[0].mxu0
        %1195 = vmatprep.mubr.f32.mxu0 0.0
        %1196 = vmatmul.mubr.f32.gmra.mrb[0].mxu0 %v782
        %v1197 = vpop.f32.mrb[0].mxu0
        %v1198 = vadd.f32 0.0, %v1197
        %v1199 = vpop.f32.mrb[0].mxu0
        %1200 = vmatprep.mubr.f32.mxu0 0.0
        %1201 = vmatmul.mubr.f32.gmra.mrb[0].mxu0 %v783
        %v1202 = vpop.f32.mrb[0].mxu0
        %v1203 = vadd.f32 0.0, %v1202
        %v1204 = vpop.f32.mrb[0].mxu0
        %1205 = vmatprep.mubr.f32.mxu0 0.0
        %1206 = vmatmul.mubr.f32.gmra.mrb[0].mxu0 %v784
        %v1207 = vpop.f32.mrb[0].mxu0
        %v1208 = vadd.f32 0.0, %v1207
        %v1209 = vpop.f32.mrb[0].mxu0
        %1210 = vmatprep.mubr.f32.mxu0 0.0
        %1211 = vmatmul.mubr.f32.gmra.mrb[0].mxu0 %v785
        %v1212 = vpop.f32.mrb[0].mxu0
        %v1213 = vadd.f32 0.0, %v1212
        %v1214 = vpop.f32.mrb[0].mxu0
        %1215 = vmatprep.mubr.f32.mxu0 0.0
        %1216 = vmatmul.mubr.f32.gmra.mrb[0].mxu0 %v786
        %v1217 = vpop.f32.mrb[0].mxu0
        %v1218 = vadd.f32 0.0, %v1217
        %v1219 = vpop.f32.mrb[0].mxu0
        %1220 = vmatprep.mubr.f32.mxu0 0.0
        %1221 = vmatmul.mubr.f32.gmra.mrb[0].mxu0 %v787
        %v1222 = vpop.f32.mrb[0].mxu0
        %v1223 = vadd.f32 0.0, %v1222
        %v1224 = vpop.f32.mrb[0].mxu0
        %1225 = vmatprep.mubr.f32.mxu0 0.0
        %1226 = vmatmul.mubr.f32.gmra.mrb[0].mxu0 %v788
        %v1227 = vpop.f32.mrb[0].mxu0
        %v1228 = vadd.f32 0.0, %v1227
        %v1229 = vpop.f32.mrb[0].mxu0
        %1230 = vmatprep.mubr.f32.mxu0 0.0
        %1231 = vmatmul.mubr.f32.gmra.mrb[0].mxu0 %v789
        %v1232 = vpop.f32.mrb[0].mxu0
        %v1233 = vadd.f32 0.0, %v1232
        %v1234 = vpop.f32.mrb[0].mxu0
        %1235 = vmatprep.mubr.f32.mxu0 0.0
        %1236 = vmatmul.mubr.f32.gmra.mrb[0].mxu0 %v790
        %v1237 = vpop.f32.mrb[0].mxu0
        %v1238 = vadd.f32 0.0, %v1237
        %v1239 = vpop.f32.mrb[0].mxu0
        %1240 = vmatprep.mubr.f32.mxu0 0.0
        %1241 = vmatmul.mubr.f32.gmra.mrb[0].mxu0 %v791
        %v1242 = vpop.f32.mrb[0].mxu0
        %v1243 = vadd.f32 0.0, %v1242
        %v1244 = vpop.f32.mrb[0].mxu0
        %1245 = vmatprep.mubr.f32.mxu0 0.0
        %1246 = vmatmul.mubr.f32.gmra.mrb[0].mxu0 %v792
        %v1247 = vpop.f32.mrb[0].mxu0
        %v1248 = vadd.f32 0.0, %v1247
        %v1249 = vpop.f32.mrb[0].mxu0
        %1250 = vmatprep.mubr.f32.mxu0 0.0
        %1251 = vmatmul.mubr.f32.gmra.mrb[0].mxu0 %v793
        %v1252 = vpop.f32.mrb[0].mxu0
        %v1253 = vadd.f32 0.0, %v1252
        %v1254 = vpop.f32.mrb[0].mxu0
        %1255 = vmatprep.mubr.f32.mxu0 0.0
        %1256 = vmatmul.mubr.f32.gmra.mrb[0].mxu0 %v794
        %v1257 = vpop.f32.mrb[0].mxu0
        %v1258 = vadd.f32 0.0, %v1257
        %v1259 = vpop.f32.mrb[0].mxu0
        %1260 = vmatprep.mubr.f32.mxu0 0.0
        %1261 = vmatmul.mubr.f32.gmra.mrb[0].mxu0 %v795
        %v1262 = vpop.f32.mrb[0].mxu0
        %v1263 = vadd.f32 0.0, %v1262
        %v1264 = vpop.f32.mrb[0].mxu0
        %1265 = vmatprep.mubr.f32.mxu0 0.0
        %1266 = vmatmul.mubr.f32.gmra.mrb[0].mxu0 %v796
        %v1267 = vpop.f32.mrb[0].mxu0
        %v1268 = vadd.f32 0.0, %v1267
        %v1269 = vpop.f32.mrb[0].mxu0
        %1270 = vmatprep.mubr.f32.mxu0 0.0
        %1271 = vmatmul.mubr.f32.gmra.mrb[0].mxu0 %v797
        %v1272 = vpop.f32.mrb[0].mxu0
        %v1273 = vadd.f32 0.0, %v1272
        %v1274 = vpop.f32.mrb[0].mxu0
        %1275 = vmatprep.mubr.f32.mxu0 0.0
        %1276 = vmatmul.mubr.f32.gmra.mrb[0].mxu0 %v798
        %v1277 = vpop.f32.mrb[0].mxu0
        %v1278 = vadd.f32 0.0, %v1277
        %v1279 = vpop.f32.mrb[0].mxu0
        %1280 = vmatprep.mubr.f32.mxu0 0.0
        %1281 = vmatmul.mubr.f32.gmra.mrb[0].mxu0 %v799
        %v1282 = vpop.f32.mrb[0].mxu0
        %v1283 = vadd.f32 0.0, %v1282
        %v1284 = vpop.f32.mrb[0].mxu0
        %1285 = vmatprep.mubr.f32.mxu0 0.0
        %1286 = vmatmul.mubr.f32.gmra.mrb[0].mxu0 %v800
        %v1287 = vpop.f32.mrb[0].mxu0
        %v1288 = vadd.f32 0.0, %v1287
        %v1289 = vpop.f32.mrb[0].mxu0
        %1290 = vmatprep.mubr.f32.mxu0 0.0
        %1291 = vmatmul.mubr.f32.gmra.mrb[0].mxu0 %v801
        %v1292 = vpop.f32.mrb[0].mxu0
        %v1293 = vadd.f32 0.0, %v1292
        %v1294 = vpop.f32.mrb[0].mxu0
        %1295 = vmatprep.mubr.f32.mxu0 0.0
        %1296 = vmatmul.mubr.f32.gmra.mrb[0].mxu0 %v802
        %v1297 = vpop.f32.mrb[0].mxu0
        %v1298 = vadd.f32 0.0, %v1297
        %v1299 = vpop.f32.mrb[0].mxu0
        %1300 = vmatprep.mubr.f32.mxu0 0.0
        %1301 = vmatmul.mubr.f32.gmra.mrb[0].mxu0 %v803
        %v1302 = vpop.f32.mrb[0].mxu0
        %v1303 = vadd.f32 0.0, %v1302
        %v1304 = vpop.f32.mrb[0].mxu0
        %1305 = vmatprep.mubr.f32.mxu0 0.0
        %1306 = vmatmul.mubr.f32.gmra.mrb[0].mxu0 %v804
        %v1307 = vpop.f32.mrb[0].mxu0
        %v1308 = vadd.f32 0.0, %v1307
        %v1309 = vpop.f32.mrb[0].mxu0
        %1310 = vmatprep.mubr.f32.mxu0 0.0
        %1311 = vmatmul.mubr.f32.gmra.mrb[0].mxu0 %v805
        %v1312 = vpop.f32.mrb[0].mxu0
        %v1313 = vadd.f32 0.0, %v1312
        %v1314 = vpop.f32.mrb[0].mxu0
        %1315 = vmatprep.mubr.f32.mxu0 0.0
        %1316 = vmatmul.mubr.f32.gmra.mrb[0].mxu0 %v806
        %v1317 = vpop.f32.mrb[0].mxu0
        %v1318 = vadd.f32 0.0, %v1317
        %v1319 = vpop.f32.mrb[0].mxu0
        %1320 = vdwg.mxu0
        %1321 = vst [vmem:[%s419] sm:$0xff] %v1163
        %1322 = vst [vmem:[%s419 + $0x8] sm:$0xff] %v1168
        %1323 = vst [vmem:[%s419 + $0x10] sm:$0xff] %v1173
        %1324 = vst [vmem:[%s419 + $0x18] sm:$0xff] %v1178
        %1325 = vst [vmem:[%s419 + $0x20] sm:$0xff] %v1183
        %1326 = vst [vmem:[%s419 + $0x28] sm:$0xff] %v1188
        %1327 = vst [vmem:[%s419 + $0x30] sm:$0xff] %v1193
        %1328 = vst [vmem:[%s419 + $0x38] sm:$0xff] %v1198
        %1329 = vst [vmem:[%s419 + $0x40] sm:$0xff] %v1203
        %1330 = vst [vmem:[%s419 + $0x48] sm:$0xff] %v1208
        %1331 = vst [vmem:[%s419 + $0x50] sm:$0xff] %v1213
        %1332 = vst [vmem:[%s419 + $0x58] sm:$0xff] %v1218
        %1333 = vst [vmem:[%s419 + $0x60] sm:$0xff] %v1223
        %1334 = vst [vmem:[%s419 + $0x68] sm:$0xff] %v1228
        %1335 = vst [vmem:[%s419 + $0x70] sm:$0xff] %v1233
        %1336 = vst [vmem:[%s419 + $0x78] sm:$0xff] %v1238
        %1337 = vst [vmem:[%s419 + $0x80] sm:$0xff] %v1243
        %1338 = vst [vmem:[%s419 + $0x88] sm:$0xff] %v1248
        %1339 = vst [vmem:[%s419 + $0x90] sm:$0xff] %v1253
        %1340 = vst [vmem:[%s419 + $0x98] sm:$0xff] %v1258
        %1341 = vst [vmem:[%s419 + $0xa0] sm:$0xff] %v1263
        %1342 = vst [vmem:[%s419 + $0xa8] sm:$0xff] %v1268
        %1343 = vst [vmem:[%s419 + $0xb0] sm:$0xff] %v1273
        %1344 = vst [vmem:[%s419 + $0xb8] sm:$0xff] %v1278
        %1345 = vst [vmem:[%s419 + $0xc0] sm:$0xff] %v1283
        %1346 = vst [vmem:[%s419 + $0xc8] sm:$0xff] %v1288
        %1347 = vst [vmem:[%s419 + $0xd0] sm:$0xff] %v1293
        %1348 = vst [vmem:[%s419 + $0xd8] sm:$0xff] %v1298
        %1349 = vst [vmem:[%s419 + $0xe0] sm:$0xff] %v1303
        %1350 = vst [vmem:[%s419 + $0xe8] sm:$0xff] %v1308
        %1351 = vst [vmem:[%s419 + $0xf0] sm:$0xff] %v1313
        %1352 = vst [vmem:[%s419 + $0xf8] sm:$0xff] %v1318
        %s1353 = sand.u32 %s236, 1
        %s1354 = scalar_lea.sflag [#allocation6], %s1353
        %s1355 = sand.u32 %s236, 1
        %s1356 = smul.addr %s1355, 256
        %s1357 = scalar_lea.vmem [#allocation10], %s1356
        %s1358 = sand.u32 %s262, 1
        %s1359 = scalar_lea.sflag [#allocation12], %s1358
        %s1360 = sand.u32 %s262, 1
        %s1361 = smul.addr %s1360, 256
        %s1362 = scalar_lea.vmem [#allocation11], %s1361
        // Predicated region
        $region69: #{tpu_custom_call.1} parent=55 // pred_check
          %p1363 = pneg %p246
        $region70: #{tpu_custom_call.1} parent=55 // pred_check_branch
          %1365 = sbr.rel (%p1363) target = $region72
        $region71: #{tpu_custom_call.1} parent=55 // pred_region
          %s1366 = smul.u32 32, %s34
          %s1368 = ssub.s32 4096, 4096
          %1369 = vsyncadd %s1354, %s1368
          %s1370 = smul.addr %s1366, 128
          %s1371 = scalar_lea.hbm %s9, %s1370
          %s1372 = sshll.u32 %s1357, 4
          %s1373 = int_to_ptr.vmem [resolvable:$true] %s1372
          %1378 = dma.vmem_to_hbm [thread:$0]  %s1373, 4096, %s1371, %s1354, 128, 128, 8
        $region72: #{tpu_custom_call.1} parent=55 // pred_fallthru
          _
        // Predicated region
        $region73: #{tpu_custom_call.1} parent=55 // pred_check
          %p1379 = pneg %p272
        $region74: #{tpu_custom_call.1} parent=55 // pred_check_branch
          %1381 = sbr.rel (%p1379) target = $region76
        $region75: #{tpu_custom_call.1} parent=55 // pred_region
          %s1382 = smul.u32 32, %s34
          %s1384 = ssub.s32 4096, 4096
          %1385 = vsyncadd %s1359, %s1384
          %s1386 = smul.addr %s1382, 128
          %s1387 = scalar_lea.hbm %s10, %s1386
          %s1388 = sshll.u32 %s1362, 4
          %s1389 = int_to_ptr.vmem [resolvable:$true] %s1388
          %1394 = dma.vmem_to_hbm [thread:$0]  %s1389, 4096, %s1387, %s1359, 128, 128, 8
        $region76: #{tpu_custom_call.1} parent=55 // pred_fallthru
          _
      $region56: #{tpu_custom_call.1} parent=5 // pred_fallthru
        _
      %p1395 = scmp.le.s32.totalorder 2, %s29
      // Predicated region
      $region77: #{tpu_custom_call.1} parent=5 // pred_check
        %p1396 = pneg %p1395
      $region78: #{tpu_custom_call.1} parent=5 // pred_check_branch
        %1398 = sbr.rel (%p1396) target = $region80
      $region79: #{tpu_custom_call.1} parent=5 // pred_region
        %s1399 = ssub.s32 %s29, 2
        // Predicated region
        $region81: #{tpu_custom_call.1} parent=79 // pred_check
          %p1400 = pneg %p252
        $region82: #{tpu_custom_call.1} parent=79 // pred_check_branch
          %1402 = sbr.rel (%p1400) target = $region84
        $region83: #{tpu_custom_call.1} parent=79 // pred_region
          %s1403 = sand.u32 %s237, 1
          %s1404 = scalar_lea.sflag [#allocation6], %s1403
          %s1405 = sand.u32 %s237, 1
          %s1406 = smul.addr %s1405, 256
          %s1407 = scalar_lea.vmem [#allocation10], %s1406
          %1408 = dma.done %s1404, 4096
        $region84: #{tpu_custom_call.1} parent=79 // pred_fallthru
          _
        // Predicated region
        $region85: #{tpu_custom_call.1} parent=79 // pred_check
          %p1409 = pneg %p278
        $region86: #{tpu_custom_call.1} parent=79 // pred_check_branch
          %1411 = sbr.rel (%p1409) target = $region88
        $region87: #{tpu_custom_call.1} parent=79 // pred_region
          %s1412 = sand.u32 %s263, 1
          %s1413 = scalar_lea.sflag [#allocation12], %s1412
          %s1414 = sand.u32 %s263, 1
          %s1415 = smul.addr %s1414, 256
          %s1416 = scalar_lea.vmem [#allocation11], %s1415
          %1417 = dma.done %s1413, 4096
        $region88: #{tpu_custom_call.1} parent=79 // pred_fallthru
          _
      $region80: #{tpu_custom_call.1} parent=5 // pred_fallthru
        _
    $region6: #{tpu_custom_call.1} parent=1 // loop_footer
      %s33 = sadd.s32 1, %s29
    $region7: #{tpu_custom_call.1} parent=1 // loop_footer_branch
      %28 = sbr.rel target = $region3
    $region8: #{tpu_custom_call.1} parent=1 // loop_exit
      _
    %1418 = vsyncpa [#allocation5], 1
    %s1419 = scalar_lea.sflag [#allocation5], 1
    %1420 = vsyncpa %s1419, 1
    %1421 = vsyncpa [#allocation8], 1
    %1422 = vsyncpa [#allocation6], 1
    %s1423 = scalar_lea.sflag [#allocation6], 1
    %1424 = vsyncpa %s1423, 1
    %1425 = vsyncpa [#allocation12], 1
    %s1426 = scalar_lea.sflag [#allocation12], 1
    %1427 = vsyncpa %s1426, 1

</llo_original>
